<compile_context>
chip_gen: v7x
topology: tpu7x:2x2x1
jax: 0.10.0
libtpu: 0.0.40
codegen_flags: <defaults>
</compile_context>

<pallas_src>
from functools import partial

import jax
import jax.numpy as jnp
from jax.experimental import pallas as pl
from jax.experimental.pallas import tpu as pltpu

F_PAD = 128                      # padded feature width (lane-dense)
TM = 128                         # destination-node row tile
TK = 128                         # source-node / contraction tile
B_PAD = 8                        # padded graph-batch (sublane-aligned)
H_PAD = 128                      # padded MLP hidden
C_PAD = 128                      # padded class dim
VMEM_LIMIT = 32 * 1024 * 1024


def _cp(dim_sems):
    return pltpu.CompilerParams(dimension_semantics=dim_sems,
                                vmem_limit_bytes=VMEM_LIMIT)


# ------------------------------ kernels ------------------------------------ #

def transform_kernel(x_ref, deg_ref, wab_ref, bab_ref, o_ref):
    # hsb = [ deg * (x@Wa + bea) | x@Wb ]  -- one wide matmul, f32 accumulate.
    acc = jnp.dot(x_ref[...], wab_ref[...], preferred_element_type=jnp.float32)
    lane = jax.lax.broadcasted_iota(jnp.int32, acc.shape, 1)
    mult = jnp.where(lane < F_PAD, deg_ref[...], 1.0)    # deg on the self half, 1 on the nbr half
    o_ref[...] = ((acc + bab_ref[...]) * mult).astype(o_ref.dtype)


def aggregate_kernel(hs_ref, hb_ref, a_ref, consts_ref, o_ref, acc_ref):
    k = pl.program_id(1)

    @pl.when(k == 0)
    def _():
        # self term: deg_in[i] * (x_i @ Wa + bea)   (already folded into hs)
        acc_ref[...] = hs_ref[...].astype(jnp.float32)

    # neighbor term: A[i, k-tile] @ (x_k @ Wb)
    acc_ref[...] += jnp.dot(a_ref[...], hb_ref[...],
                            preferred_element_type=jnp.float32)

    @pl.when(k == pl.num_programs(1) - 1)
    def _():
        z = acc_ref[...] + consts_ref[0:1, :]                       # + bp
        z = jnp.where(z >= 0.0, z, 0.2 * z)                         # LeakyReLU(0.2)
        o_ref[...] = (z * consts_ref[1:2, :]
                      + consts_ref[2:3, :]).astype(o_ref.dtype)     # BatchNorm1d (eval)


def pool_mlp_kernel(p_ref, z_ref, invc_ref, w1_ref, b1_ref, w2_ref, b2_ref,
                    o_ref, acc_ref):
    k = pl.program_id(0)

    @pl.when(k == 0)
    def _():
        acc_ref[...] = jnp.zeros_like(acc_ref)

    # per-graph sum over this node tile (one-hot P, exact in bf16)
    acc_ref[...] += jnp.dot(p_ref[...], z_ref[...],
                            preferred_element_type=jnp.float32)

    @pl.when(k == pl.num_programs(0) - 1)
    def _():
        pooled = (acc_ref[...] * invc_ref[...]).astype(jnp.bfloat16)   # mean pool
        h = jnp.dot(pooled, w1_ref[...], preferred_element_type=jnp.float32) + b1_ref[...]
        h = jnp.maximum(h, 0.0).astype(jnp.bfloat16)
        o_ref[...] = jnp.dot(h, w2_ref[...], preferred_element_type=jnp.float32) + b2_ref[...]


# ------------------------------ wrappers ------------------------------------ #

def gcn_transform(z, deg_pad, wab, bab):
    n_p = z.shape[0]
    return pl.pallas_call(
        transform_kernel,
        out_shape=jax.ShapeDtypeStruct((n_p, 2 * F_PAD), jnp.bfloat16),
        grid_spec=pltpu.PrefetchScalarGridSpec(
            num_scalar_prefetch=0,
            grid=(n_p // TM,),
            in_specs=[pl.BlockSpec((TM, F_PAD), lambda i: (i, 0)),
                      pl.BlockSpec((TM, 1), lambda i: (i, 0)),
                      pl.BlockSpec((F_PAD, 2 * F_PAD), lambda i: (0, 0)),
                      pl.BlockSpec((1, 2 * F_PAD), lambda i: (0, 0))],
            out_specs=pl.BlockSpec((TM, 2 * F_PAD), lambda i: (i, 0))),
        compiler_params=_cp(("parallel",)),
    )(z, deg_pad, wab, bab)


def gcn_aggregate(hsb, a_pad, consts):
    n_p = a_pad.shape[0]
    return pl.pallas_call(
        aggregate_kernel,
        out_shape=jax.ShapeDtypeStruct((n_p, F_PAD), jnp.bfloat16),
        grid_spec=pltpu.PrefetchScalarGridSpec(
            num_scalar_prefetch=0,
            grid=(n_p // TM, n_p // TK),
            in_specs=[pl.BlockSpec((TM, F_PAD), lambda i, k: (i, 0)),   # hs half of hsb
                      pl.BlockSpec((TK, F_PAD), lambda i, k: (k, 1)),   # hb half of hsb
                      pl.BlockSpec((TM, TK),    lambda i, k: (i, k)),   # A tile
                      pl.BlockSpec((8, F_PAD),  lambda i, k: (0, 0))],  # [bp; scale; shift]
            out_specs=pl.BlockSpec((TM, F_PAD), lambda i, k: (i, 0)),
            scratch_shapes=[pltpu.VMEM((TM, F_PAD), jnp.float32)]),
        compiler_params=_cp(("parallel", "arbitrary")),
    )(hsb, hsb, a_pad, consts)


def pool_and_mlp(z, p_onehot, inv_counts, mlp):
    n_p = z.shape[0]
    return pl.pallas_call(
        pool_mlp_kernel,
        out_shape=jax.ShapeDtypeStruct((B_PAD, C_PAD), jnp.float32),
        grid_spec=pltpu.PrefetchScalarGridSpec(
            num_scalar_prefetch=0,
            grid=(n_p // TK,),
            in_specs=[pl.BlockSpec((B_PAD, TK),    lambda k: (0, k)),
                      pl.BlockSpec((TK, F_PAD),    lambda k: (k, 0)),
                      pl.BlockSpec((B_PAD, 1),     lambda k: (0, 0)),
                      pl.BlockSpec((F_PAD, H_PAD), lambda k: (0, 0)),
                      pl.BlockSpec((1, H_PAD),     lambda k: (0, 0)),
                      pl.BlockSpec((H_PAD, C_PAD), lambda k: (0, 0)),
                      pl.BlockSpec((1, C_PAD),     lambda k: (0, 0))],
            out_specs=pl.BlockSpec((B_PAD, C_PAD), lambda k: (0, 0)),
            scratch_shapes=[pltpu.VMEM((B_PAD, F_PAD), jnp.float32)]),
        compiler_params=_cp(("arbitrary",)),
    )(p_onehot, z, inv_counts, mlp["w1"], mlp["b1"], mlp["w2"], mlp["b2"])


@partial(jax.jit, static_argnums=(7, 8))
def bgb_gcn_forward(x_pad, a_pad, deg_pad, p_onehot, inv_counts,
                    layer_params, mlp_params, n_graphs, n_classes):
    z = x_pad
    for p in layer_params:
        hsb = gcn_transform(z, deg_pad, p["wab"], p["bab"])
        z = gcn_aggregate(hsb, a_pad, p["consts"])
    # prepool = Identity for mean pooling
    out_pad = pool_and_mlp(z, p_onehot, inv_counts, mlp_params)
    return out_pad[:n_graphs, :n_classes]


# ------------------------------ params (raw + folded/padded) ----------------- #

def _glorot(key, shape):
    fan_in, fan_out = shape
    lim = (6.0 / (fan_in + fan_out)) ** 0.5
    return jax.random.uniform(key, shape, jnp.float32, -lim, lim)


def init_gcn_block_raw(key, in_dim, hidden_dim, proj_dim):
    ks = jax.random.split(key, 6)
    eps = 1e-5
    return dict(
        wlin=_glorot(ks[0], (in_dim, hidden_dim)),               # GCNConv.lin (bias=False)
        w1=_glorot(ks[1], (hidden_dim, hidden_dim)),             # edge_lin half for x_i (dst)
        w2=_glorot(ks[2], (hidden_dim, hidden_dim)),             # edge_lin half for x_j (src)
        be=jax.random.uniform(ks[3], (1, hidden_dim), jnp.float32, -0.1, 0.1),
        wproj=_glorot(ks[4], (hidden_dim, proj_dim)),
        bp=jax.random.uniform(ks[5], (1, proj_dim), jnp.float32, -0.1, 0.1),
        # BatchNorm1d eval with fresh stats: gamma=1, beta=0, mean=0, var=1
        bn_scale=jnp.full((1, proj_dim), 1.0 / jnp.sqrt(1.0 + eps), jnp.float32),
        bn_shift=jnp.zeros((1, proj_dim), jnp.float32),
    )


def fold_and_pad_block(raw, in_dim, proj_dim):
    wa = raw["wlin"] @ raw["w1"] @ raw["wproj"]      # [in_dim, proj_dim]
    wb = raw["wlin"] @ raw["w2"] @ raw["wproj"]
    bea = raw["be"] @ raw["wproj"]                   # [1, proj_dim]
    wab = jnp.zeros((F_PAD, 2 * F_PAD), jnp.float32)
    wab = wab.at[:in_dim, :proj_dim].set(wa)
    wab = wab.at[:in_dim, F_PAD:F_PAD + proj_dim].set(wb)
    bab = jnp.zeros((1, 2 * F_PAD), jnp.float32).at[0, :proj_dim].set(bea[0])
    consts = jnp.zeros((8, F_PAD), jnp.float32)
    consts = consts.at[0, :proj_dim].set(raw["bp"][0])                     # bp
    consts = consts.at[1, :].set(1.0)
    consts = consts.at[1, :proj_dim].set(raw["bn_scale"][0])               # BN scale
    consts = consts.at[2, :proj_dim].set(raw["bn_shift"][0])               # BN shift
    return dict(wab=wab.astype(jnp.bfloat16), bab=bab, consts=consts)


def init_mlp_raw(key, in_dim, hidden, n_classes):
    ks = jax.random.split(key, 4)
    return dict(w1=_glorot(ks[0], (in_dim, hidden)),
                b1=jax.random.uniform(ks[1], (1, hidden), jnp.float32, -0.1, 0.1),
                w2=_glorot(ks[2], (hidden, n_classes)),
                b2=jax.random.uniform(ks[3], (1, n_classes), jnp.float32, -0.1, 0.1))


def pad_mlp(raw, in_dim, hidden, n_classes):
    w1 = jnp.zeros((F_PAD, H_PAD), jnp.float32).at[:in_dim, :hidden].set(raw["w1"])
    b1 = jnp.zeros((1, H_PAD), jnp.float32).at[0, :hidden].set(raw["b1"][0])
    w2 = jnp.zeros((H_PAD, C_PAD), jnp.float32).at[:hidden, :n_classes].set(raw["w2"])
    b2 = jnp.zeros((1, C_PAD), jnp.float32).at[0, :n_classes].set(raw["b2"][0])
    return dict(w1=w1.astype(jnp.bfloat16), b1=b1,
                w2=w2.astype(jnp.bfloat16), b2=b2)


# ------------------------------ pure-JAX reference --------------------------- #

def reference_forward(x, A, deg, batch_ids, n_graphs, layer_raw, mlp_raw):
    z = x
    for p in layer_raw:
        h = z @ p["wlin"]
        agg = deg * (h @ p["w1"] + p["be"]) + A @ (h @ p["w2"])
        zz = agg @ p["wproj"] + p["bp"]
        zz = jnp.where(zz >= 0.0, zz, 0.2 * zz)
        z = zz * p["bn_scale"] + p["bn_shift"]
    onehot = (batch_ids[None, :] == jnp.arange(n_graphs)[:, None]).astype(jnp.float32)
    pooled = (onehot @ z) / onehot.sum(axis=1, keepdims=True)
    h = jnp.maximum(pooled @ mlp_raw["w1"] + mlp_raw["b1"], 0.0)
    return h @ mlp_raw["w2"] + mlp_raw["b2"]


# ------------------------------ main ----------------------------------------- #

if __name__ == "__main__":
    key = jax.random.PRNGKey(0)
    keys = jax.random.split(key, 16)

    # small, forward-consistent config (two 80-node graphs -> exercises a 2x2 tile grid)
    batch_graphs = 2
    num_nodes = 80
    input_dim = 8
    hidden_dim = 32
    final_node_dim = 16
    n_classes = 2
    num_layers = 2
    edges_per_graph = 200
    mlp_hidden = 32

    N = batch_graphs * num_nodes
    n_pad = ((N + TM - 1) // TM) * TM

    # data.x, data.edge_index (edges stay within each graph), data.batch
    x = jax.random.normal(keys[0], (N, input_dim), jnp.float32)
    src0 = jax.random.randint(keys[1], (edges_per_graph,), 0, num_nodes)
    dst0 = jax.random.randint(keys[2], (edges_per_graph,), 0, num_nodes)
    src1 = jax.random.randint(keys[3], (edges_per_graph,), 0, num_nodes) + num_nodes
    dst1 = jax.random.randint(keys[4], (edges_per_graph,), 0, num_nodes) + num_nodes
    src = jnp.concatenate([src0, src1])
    dst = jnp.concatenate([dst0, dst1])
    batch_ids = jnp.repeat(jnp.arange(batch_graphs), num_nodes)
    # data.edge_attr is unused for mp_type='node_concate'

    # glue: dense adjacency A[dst, src], in-degree, per-graph pooling matrix
    A = jnp.zeros((N, N), jnp.float32).at[dst, src].add(1.0)
    deg = A.sum(axis=1, keepdims=True)

    x_pad = jnp.zeros((n_pad, F_PAD), jnp.float32).at[:N, :input_dim].set(x).astype(jnp.bfloat16)
    a_pad = jnp.zeros((n_pad, n_pad), jnp.float32).at[:N, :N].set(A).astype(jnp.bfloat16)
    deg_pad = jnp.zeros((n_pad, 1), jnp.float32).at[:N].set(deg)
    p_onehot = jnp.zeros((B_PAD, n_pad), jnp.float32)
    p_onehot = p_onehot.at[batch_ids, jnp.arange(N)].set(1.0).astype(jnp.bfloat16)
    counts = jnp.zeros((B_PAD, 1), jnp.float32).at[:batch_graphs, 0].set(
        jnp.bincount(batch_ids, length=batch_graphs).astype(jnp.float32))
    inv_counts = jnp.where(counts > 0, 1.0 / jnp.maximum(counts, 1.0), 0.0)

    # parameters (deterministic, synthetic); keep raw f32 for the reference
    layer_raw, layer_params = [], []
    gcn_in = input_dim
    for i in range(num_layers - 1):
        raw = init_gcn_block_raw(keys[6 + i], gcn_in, hidden_dim, hidden_dim)
        layer_raw.append(raw)
        layer_params.append(fold_and_pad_block(raw, gcn_in, hidden_dim))
        gcn_in = hidden_dim
    raw = init_gcn_block_raw(keys[10], gcn_in, hidden_dim, final_node_dim)
    layer_raw.append(raw)
    layer_params.append(fold_and_pad_block(raw, gcn_in, final_node_dim))

    mlp_raw = init_mlp_raw(keys[11], final_node_dim, mlp_hidden, n_classes)
    mlp_params = pad_mlp(mlp_raw, final_node_dim, mlp_hidden, n_classes)

    out = bgb_gcn_forward(x_pad, a_pad, deg_pad, p_onehot, inv_counts,
                          layer_params, mlp_params, batch_graphs, n_classes)
    out = jax.block_until_ready(out)
    assert out.shape == (batch_graphs, n_classes)
    assert bool(jnp.all(jnp.isfinite(out)))

    # validate bf16 kernel path against f32 pure-JAX reference (loose tol for bf16 drift)
    ref = reference_forward(x, A, deg, batch_ids, batch_graphs, layer_raw, mlp_raw)
    err = float(jnp.max(jnp.abs(out - ref)))
    tol = 0.1 * max(float(jnp.max(jnp.abs(ref))), 1.0)
    assert err <= tol, (err, tol)

    print("KERNEL_OK")
</pallas_src>

<mosaic_0001>
module attributes {stable_mosaic.version = 11 : i64} {
  func.func @aggregate_kernel(%arg0: i32, %arg1: i32, %arg2: memref<128x128xbf16, #tpu.memory_space<vmem>>, %arg3: memref<128x128xbf16, #tpu.memory_space<vmem>>, %arg4: memref<128x128xbf16, #tpu.memory_space<vmem>>, %arg5: memref<8x128xf32, #tpu.memory_space<vmem>>, %arg6: memref<128x128xbf16, #tpu.memory_space<vmem>>, %arg7: memref<128x128xf32, #tpu.memory_space<vmem>>) attributes {dimension_semantics = [#tpu.dimension_semantics<parallel>, #tpu.dimension_semantics<arbitrary>], iteration_bounds = array<i64: 2, 2>, scalar_prefetch = 0 : i64, scratch_operands = 1 : i64, tpu.core_type = #tpu.core_type<tc>, window_params = [{transform_indices = @transform_0, window_bounds = array<i64: 128, 128>}, {transform_indices = @transform_1, window_bounds = array<i64: 128, 128>}, {transform_indices = @transform_2, window_bounds = array<i64: 128, 128>}, {pipeline_mode = #tpu.pipeline_mode<synchronous>, transform_indices = @transform_3, window_bounds = array<i64: 8, 128>}, {transform_indices = @transform_4, window_bounds = array<i64: 128, 128>}]} {
    %c0_i32 = arith.constant 0 : i32
    %0 = arith.cmpi eq, %arg1, %c0_i32 : i32
    %1 = arith.extui %0 : i1 to i32
    %c0_i32_0 = arith.constant 0 : i32
    %2 = arith.cmpi ne, %1, %c0_i32_0 : i32
    scf.if %2 {
      %c0_9 = arith.constant 0 : index
      %c0_10 = arith.constant 0 : index
      %12 = vector.load %arg2[%c0_9, %c0_10] : memref<128x128xbf16, #tpu.memory_space<vmem>>, vector<128x128xbf16>
      %13 = arith.extf %12 : vector<128x128xbf16> to vector<128x128xf32>
      %c0_11 = arith.constant 0 : index
      %c0_12 = arith.constant 0 : index
      %14 = vector.load %arg7[%c0_11, %c0_12] : memref<128x128xf32, #tpu.memory_space<vmem>>, vector<128x128xf32>
      tpu.vector_store %arg7[%c0_11, %c0_12], %13 {strides = array<i32>} : memref<128x128xf32, #tpu.memory_space<vmem>>, vector<128x128xf32>,
    } else {
    }
    %c0 = arith.constant 0 : index
    %c0_1 = arith.constant 0 : index
    %3 = vector.load %arg7[%c0, %c0_1] : memref<128x128xf32, #tpu.memory_space<vmem>>, vector<128x128xf32>
    %c0_2 = arith.constant 0 : index
    %c0_3 = arith.constant 0 : index
    %4 = vector.load %arg4[%c0_2, %c0_3] : memref<128x128xbf16, #tpu.memory_space<vmem>>, vector<128x128xbf16>
    %c0_4 = arith.constant 0 : index
    %c0_5 = arith.constant 0 : index
    %5 = vector.load %arg3[%c0_4, %c0_5] : memref<128x128xbf16, #tpu.memory_space<vmem>>, vector<128x128xbf16>
    %cst = arith.constant dense<0.000000e+00> : vector<128x128xf32>
    %6 = tpu.matmul %4, %5, %cst {dimension_numbers = #tpu.dot_dimension_numbers<[1], [0], [0], [1], [0, 0, 1, 1], [], []>} : vector<128x128xbf16>, vector<128x128xbf16>, vector<128x128xf32> -> vector<128x128xf32>
    %7 = arith.addf %3, %6 : vector<128x128xf32>
    %c0_6 = arith.constant 0 : index
    %c0_7 = arith.constant 0 : index
    %8 = vector.load %arg7[%c0_6, %c0_7] : memref<128x128xf32, #tpu.memory_space<vmem>>, vector<128x128xf32>
    tpu.vector_store %arg7[%c0_6, %c0_7], %7 {strides = array<i32>} : memref<128x128xf32, #tpu.memory_space<vmem>>, vector<128x128xf32>,
    %c1_i32 = arith.constant 1 : i32
    %9 = arith.cmpi eq, %arg1, %c1_i32 : i32
    %10 = arith.extui %9 : i1 to i32
    %c0_i32_8 = arith.constant 0 : i32
    %11 = arith.cmpi ne, %10, %c0_i32_8 : i32
    scf.if %11 {
      %c0_9 = arith.constant 0 : index
      %c0_10 = arith.constant 0 : index
      %12 = vector.load %arg7[%c0_9, %c0_10] : memref<128x128xf32, #tpu.memory_space<vmem>>, vector<128x128xf32>
      %c0_11 = arith.constant 0 : index
      %c0_12 = arith.constant 0 : index
      %13 = vector.load %arg5[%c0_11, %c0_12] : memref<8x128xf32, #tpu.memory_space<vmem>>, vector<1x128xf32>
      %14 = vector.broadcast %13 : vector<1x128xf32> to vector<128x128xf32>
      %15 = arith.addf %12, %14 : vector<128x128xf32>
      %cst_13 = arith.constant 0.000000e+00 : f32
      %16 = vector.broadcast %cst_13 : f32 to vector<128x128xf32>
      %17 = arith.cmpf oge, %15, %16 : vector<128x128xf32>
      %cst_14 = arith.constant 2.000000e-01 : f32
      %18 = vector.broadcast %cst_14 : f32 to vector<128x128xf32>
      %19 = arith.mulf %18, %15 : vector<128x128xf32>
      %20 = arith.select %17, %15, %19 : vector<128x128xi1>, vector<128x128xf32>
      %c1 = arith.constant 1 : index
      %c0_15 = arith.constant 0 : index
      %21 = vector.load %arg5[%c1, %c0_15] : memref<8x128xf32, #tpu.memory_space<vmem>>, vector<1x128xf32>
      %22 = vector.broadcast %21 : vector<1x128xf32> to vector<128x128xf32>
      %23 = arith.mulf %20, %22 : vector<128x128xf32>
      %c2 = arith.constant 2 : index
      %c0_16 = arith.constant 0 : index
      %24 = vector.load %arg5[%c2, %c0_16] : memref<8x128xf32, #tpu.memory_space<vmem>>, vector<1x128xf32>
      %25 = vector.broadcast %24 : vector<1x128xf32> to vector<128x128xf32>
      %26 = arith.addf %23, %25 : vector<128x128xf32>
      %27 = arith.truncf %26 : vector<128x128xf32> to vector<128x128xbf16>
      %c0_17 = arith.constant 0 : index
      %c0_18 = arith.constant 0 : index
      %28 = vector.load %arg6[%c0_17, %c0_18] : memref<128x128xbf16, #tpu.memory_space<vmem>>, vector<128x128xbf16>
      tpu.vector_store %arg6[%c0_17, %c0_18], %27 {strides = array<i32>} : memref<128x128xbf16, #tpu.memory_space<vmem>>, vector<128x128xbf16>,
    } else {
    }
    return
  }
  func.func @transform_0(%arg0: i32, %arg1: i32) -> (i32, i32) {
    %c0_i32 = arith.constant 0 : i32
    %c0_i32_0 = arith.constant 0 : i32
    return %arg0, %c0_i32 : i32, i32
  }
  func.func @transform_1(%arg0: i32, %arg1: i32) -> (i32, i32) {
    %c1_i32 = arith.constant 1 : i32
    %c0_i32 = arith.constant 0 : i32
    return %arg1, %c1_i32 : i32, i32
  }
  func.func @transform_2(%arg0: i32, %arg1: i32) -> (i32, i32) {
    %c0_i32 = arith.constant 0 : i32
    return %arg0, %arg1 : i32, i32
  }
  func.func @transform_3(%arg0: i32, %arg1: i32) -> (i32, i32) {
    %c0_i32 = arith.constant 0 : i32
    %c0_i32_0 = arith.constant 0 : i32
    %c0_i32_1 = arith.constant 0 : i32
    return %c0_i32, %c0_i32_0 : i32, i32
  }
  func.func @transform_4(%arg0: i32, %arg1: i32) -> (i32, i32) {
    %c0_i32 = arith.constant 0 : i32
    %c0_i32_0 = arith.constant 0 : i32
    return %arg0, %c0_i32 : i32, i32
  }
}

module attributes {stable_mosaic.version = 11 : i64} {
  func.func @transform_kernel(%arg0: i32, %arg1: memref<128x128xbf16, #tpu.memory_space<vmem>>, %arg2: memref<128x1xf32, #tpu.memory_space<vmem>>, %arg3: memref<128x256xbf16, #tpu.memory_space<vmem>>, %arg4: memref<1x256xf32, #tpu.memory_space<vmem>>, %arg5: memref<128x256xbf16, #tpu.memory_space<vmem>>) attributes {dimension_semantics = [#tpu.dimension_semantics<parallel>], iteration_bounds = array<i64: 2>, scalar_prefetch = 0 : i64, scratch_operands = 0 : i64, tpu.core_type = #tpu.core_type<tc>, window_params = [{transform_indices = @transform_0, window_bounds = array<i64: 128, 128>}, {transform_indices = @transform_1, window_bounds = array<i64: 128, 1>}, {pipeline_mode = #tpu.pipeline_mode<synchronous>, transform_indices = @transform_2, window_bounds = array<i64: 128, 256>}, {pipeline_mode = #tpu.pipeline_mode<synchronous>, transform_indices = @transform_3, window_bounds = array<i64: 1, 256>}, {transform_indices = @transform_4, window_bounds = array<i64: 128, 256>}]} {
    %c0 = arith.constant 0 : index
    %c0_0 = arith.constant 0 : index
    %0 = vector.load %arg1[%c0, %c0_0] : memref<128x128xbf16, #tpu.memory_space<vmem>>, vector<128x128xbf16>
    %c0_1 = arith.constant 0 : index
    %c0_2 = arith.constant 0 : index
    %1 = vector.load %arg3[%c0_1, %c0_2] : memref<128x256xbf16, #tpu.memory_space<vmem>>, vector<128x256xbf16>
    %cst = arith.constant dense<0.000000e+00> : vector<128x256xf32>
    %2 = tpu.matmul %0, %1, %cst {dimension_numbers = #tpu.dot_dimension_numbers<[1], [0], [0], [1], [0, 0, 1, 1], [], []>} : vector<128x128xbf16>, vector<128x256xbf16>, vector<128x256xf32> -> vector<128x256xf32>
    %3 = tpu.iota {dimensions = array<i32: 1>} : vector<128x256xi32>
    %c128_i32 = arith.constant 128 : i32
    %4 = vector.broadcast %c128_i32 : i32 to vector<128x256xi32>
    %5 = arith.cmpi slt, %3, %4 : vector<128x256xi32>
    %c0_3 = arith.constant 0 : index
    %c0_4 = arith.constant 0 : index
    %6 = vector.load %arg2[%c0_3, %c0_4] : memref<128x1xf32, #tpu.memory_space<vmem>>, vector<128x1xf32>
    %cst_5 = arith.constant 1.000000e+00 : f32
    %7 = vector.shape_cast %6 : vector<128x1xf32> to vector<128x1xf32>
    %8 = vector.broadcast %7 : vector<128x1xf32> to vector<128x256xf32>
    %9 = vector.broadcast %cst_5 : f32 to vector<128x256xf32>
    %10 = arith.select %5, %8, %9 : vector<128x256xi1>, vector<128x256xf32>
    %c0_6 = arith.constant 0 : index
    %c0_7 = arith.constant 0 : index
    %11 = vector.load %arg4[%c0_6, %c0_7] : memref<1x256xf32, #tpu.memory_space<vmem>>, vector<1x256xf32>
    %12 = vector.broadcast %11 : vector<1x256xf32> to vector<128x256xf32>
    %13 = arith.addf %2, %12 : vector<128x256xf32>
    %14 = arith.mulf %13, %10 : vector<128x256xf32>
    %15 = arith.truncf %14 : vector<128x256xf32> to vector<128x256xbf16>
    %c0_8 = arith.constant 0 : index
    %c0_9 = arith.constant 0 : index
    %16 = vector.load %arg5[%c0_8, %c0_9] : memref<128x256xbf16, #tpu.memory_space<vmem>>, vector<128x256xbf16>
    tpu.vector_store %arg5[%c0_8, %c0_9], %15 {strides = array<i32>} : memref<128x256xbf16, #tpu.memory_space<vmem>>, vector<128x256xbf16>,
    return
  }
  func.func @transform_0(%arg0: i32) -> (i32, i32) {
    %c0_i32 = arith.constant 0 : i32
    %c0_i32_0 = arith.constant 0 : i32
    return %arg0, %c0_i32 : i32, i32
  }
  func.func @transform_1(%arg0: i32) -> (i32, i32) {
    %c0_i32 = arith.constant 0 : i32
    %c0_i32_0 = arith.constant 0 : i32
    return %arg0, %c0_i32 : i32, i32
  }
  func.func @transform_2(%arg0: i32) -> (i32, i32) {
    %c0_i32 = arith.constant 0 : i32
    %c0_i32_0 = arith.constant 0 : i32
    %c0_i32_1 = arith.constant 0 : i32
    return %c0_i32, %c0_i32_0 : i32, i32
  }
  func.func @transform_3(%arg0: i32) -> (i32, i32) {
    %c0_i32 = arith.constant 0 : i32
    %c0_i32_0 = arith.constant 0 : i32
    %c0_i32_1 = arith.constant 0 : i32
    return %c0_i32, %c0_i32_0 : i32, i32
  }
  func.func @transform_4(%arg0: i32) -> (i32, i32) {
    %c0_i32 = arith.constant 0 : i32
    %c0_i32_0 = arith.constant 0 : i32
    return %arg0, %c0_i32 : i32, i32
  }
}

module attributes {stable_mosaic.version = 11 : i64} {
  func.func @pool_mlp_kernel(%arg0: i32, %arg1: memref<8x128xbf16, #tpu.memory_space<vmem>>, %arg2: memref<128x128xbf16, #tpu.memory_space<vmem>>, %arg3: memref<8x1xf32, #tpu.memory_space<vmem>>, %arg4: memref<128x128xbf16, #tpu.memory_space<vmem>>, %arg5: memref<1x128xf32, #tpu.memory_space<vmem>>, %arg6: memref<128x128xbf16, #tpu.memory_space<vmem>>, %arg7: memref<1x128xf32, #tpu.memory_space<vmem>>, %arg8: memref<8x128xf32, #tpu.memory_space<vmem>>, %arg9: memref<8x128xf32, #tpu.memory_space<vmem>>) attributes {dimension_semantics = [#tpu.dimension_semantics<arbitrary>], iteration_bounds = array<i64: 2>, scalar_prefetch = 0 : i64, scratch_operands = 1 : i64, tpu.core_type = #tpu.core_type<tc>, window_params = [{transform_indices = @transform_0, window_bounds = array<i64: 8, 128>}, {transform_indices = @transform_1, window_bounds = array<i64: 128, 128>}, {pipeline_mode = #tpu.pipeline_mode<synchronous>, transform_indices = @transform_2, window_bounds = array<i64: 8, 1>}, {pipeline_mode = #tpu.pipeline_mode<synchronous>, transform_indices = @transform_3, window_bounds = array<i64: 128, 128>}, {pipeline_mode = #tpu.pipeline_mode<synchronous>, transform_indices = @transform_4, window_bounds = array<i64: 1, 128>}, {pipeline_mode = #tpu.pipeline_mode<synchronous>, transform_indices = @transform_5, window_bounds = array<i64: 128, 128>}, {pipeline_mode = #tpu.pipeline_mode<synchronous>, transform_indices = @transform_6, window_bounds = array<i64: 1, 128>}, {pipeline_mode = #tpu.pipeline_mode<synchronous>, transform_indices = @transform_7, window_bounds = array<i64: 8, 128>}]} {
    %c0_i32 = arith.constant 0 : i32
    %0 = arith.cmpi eq, %arg0, %c0_i32 : i32
    %1 = arith.extui %0 : i1 to i32
    %c0_i32_0 = arith.constant 0 : i32
    %2 = arith.cmpi ne, %1, %c0_i32_0 : i32
    scf.if %2 {
      %cst_9 = arith.constant 0.000000e+00 : f32
      %12 = vector.broadcast %cst_9 : f32 to vector<8x128xf32>
      %c0_10 = arith.constant 0 : index
      %c0_11 = arith.constant 0 : index
      %13 = vector.load %arg9[%c0_10, %c0_11] : memref<8x128xf32, #tpu.memory_space<vmem>>, vector<8x128xf32>
      tpu.vector_store %arg9[%c0_10, %c0_11], %12 {strides = array<i32>} : memref<8x128xf32, #tpu.memory_space<vmem>>, vector<8x128xf32>,
    } else {
    }
    %c0 = arith.constant 0 : index
    %c0_1 = arith.constant 0 : index
    %3 = vector.load %arg9[%c0, %c0_1] : memref<8x128xf32, #tpu.memory_space<vmem>>, vector<8x128xf32>
    %c0_2 = arith.constant 0 : index
    %c0_3 = arith.constant 0 : index
    %4 = vector.load %arg1[%c0_2, %c0_3] : memref<8x128xbf16, #tpu.memory_space<vmem>>, vector<8x128xbf16>
    %c0_4 = arith.constant 0 : index
    %c0_5 = arith.constant 0 : index
    %5 = vector.load %arg2[%c0_4, %c0_5] : memref<128x128xbf16, #tpu.memory_space<vmem>>, vector<128x128xbf16>
    %cst = arith.constant dense<0.000000e+00> : vector<8x128xf32>
    %6 = tpu.matmul %4, %5, %cst {dimension_numbers = #tpu.dot_dimension_numbers<[1], [0], [0], [1], [0, 0, 1, 1], [], []>} : vector<8x128xbf16>, vector<128x128xbf16>, vector<8x128xf32> -> vector<8x128xf32>
    %7 = arith.addf %3, %6 : vector<8x128xf32>
    %c0_6 = arith.constant 0 : index
    %c0_7 = arith.constant 0 : index
    %8 = vector.load %arg9[%c0_6, %c0_7] : memref<8x128xf32, #tpu.memory_space<vmem>>, vector<8x128xf32>
    tpu.vector_store %arg9[%c0_6, %c0_7], %7 {strides = array<i32>} : memref<8x128xf32, #tpu.memory_space<vmem>>, vector<8x128xf32>,
    %c1_i32 = arith.constant 1 : i32
    %9 = arith.cmpi eq, %arg0, %c1_i32 : i32
    %10 = arith.extui %9 : i1 to i32
    %c0_i32_8 = arith.constant 0 : i32
    %11 = arith.cmpi ne, %10, %c0_i32_8 : i32
    scf.if %11 {
      %c0_9 = arith.constant 0 : index
      %c0_10 = arith.constant 0 : index
      %12 = vector.load %arg9[%c0_9, %c0_10] : memref<8x128xf32, #tpu.memory_space<vmem>>, vector<8x128xf32>
      %c0_11 = arith.constant 0 : index
      %c0_12 = arith.constant 0 : index
      %13 = vector.load %arg3[%c0_11, %c0_12] : memref<8x1xf32, #tpu.memory_space<vmem>>, vector<8x1xf32>
      %14 = vector.broadcast %13 : vector<8x1xf32> to vector<8x128xf32>
      %15 = arith.mulf %12, %14 : vector<8x128xf32>
      %16 = arith.truncf %15 : vector<8x128xf32> to vector<8x128xbf16>
      %c0_13 = arith.constant 0 : index
      %c0_14 = arith.constant 0 : index
      %17 = vector.load %arg4[%c0_13, %c0_14] : memref<128x128xbf16, #tpu.memory_space<vmem>>, vector<128x128xbf16>
      %cst_15 = arith.constant dense<0.000000e+00> : vector<8x128xf32>
      %18 = tpu.matmul %16, %17, %cst_15 {dimension_numbers = #tpu.dot_dimension_numbers<[1], [0], [0], [1], [0, 0, 1, 1], [], []>} : vector<8x128xbf16>, vector<128x128xbf16>, vector<8x128xf32> -> vector<8x128xf32>
      %c0_16 = arith.constant 0 : index
      %c0_17 = arith.constant 0 : index
      %19 = vector.load %arg5[%c0_16, %c0_17] : memref<1x128xf32, #tpu.memory_space<vmem>>, vector<1x128xf32>
      %20 = vector.broadcast %19 : vector<1x128xf32> to vector<8x128xf32>
      %21 = arith.addf %18, %20 : vector<8x128xf32>
      %cst_18 = arith.constant 0.000000e+00 : f32
      %22 = vector.broadcast %cst_18 : f32 to vector<8x128xf32>
      %23 = arith.maximumf %21, %22 : vector<8x128xf32>
      %24 = arith.truncf %23 : vector<8x128xf32> to vector<8x128xbf16>
      %c0_19 = arith.constant 0 : index
      %c0_20 = arith.constant 0 : index
      %25 = vector.load %arg6[%c0_19, %c0_20] : memref<128x128xbf16, #tpu.memory_space<vmem>>, vector<128x128xbf16>
      %cst_21 = arith.constant dense<0.000000e+00> : vector<8x128xf32>
      %26 = tpu.matmul %24, %25, %cst_21 {dimension_numbers = #tpu.dot_dimension_numbers<[1], [0], [0], [1], [0, 0, 1, 1], [], []>} : vector<8x128xbf16>, vector<128x128xbf16>, vector<8x128xf32> -> vector<8x128xf32>
      %c0_22 = arith.constant 0 : index
      %c0_23 = arith.constant 0 : index
      %27 = vector.load %arg7[%c0_22, %c0_23] : memref<1x128xf32, #tpu.memory_space<vmem>>, vector<1x128xf32>
      %28 = vector.broadcast %27 : vector<1x128xf32> to vector<8x128xf32>
      %29 = arith.addf %26, %28 : vector<8x128xf32>
      %c0_24 = arith.constant 0 : index
      %c0_25 = arith.constant 0 : index
      %30 = vector.load %arg8[%c0_24, %c0_25] : memref<8x128xf32, #tpu.memory_space<vmem>>, vector<8x128xf32>
      tpu.vector_store %arg8[%c0_24, %c0_25], %29 {strides = array<i32>} : memref<8x128xf32, #tpu.memory_space<vmem>>, vector<8x128xf32>,
    } else {
    }
    return
  }
  func.func @transform_0(%arg0: i32) -> (i32, i32) {
    %c0_i32 = arith.constant 0 : i32
    %c0_i32_0 = arith.constant 0 : i32
    return %c0_i32, %arg0 : i32, i32
  }
  func.func @transform_1(%arg0: i32) -> (i32, i32) {
    %c0_i32 = arith.constant 0 : i32
    %c0_i32_0 = arith.constant 0 : i32
    return %arg0, %c0_i32 : i32, i32
  }
  func.func @transform_2(%arg0: i32) -> (i32, i32) {
    %c0_i32 = arith.constant 0 : i32
    %c0_i32_0 = arith.constant 0 : i32
    %c0_i32_1 = arith.constant 0 : i32
    return %c0_i32, %c0_i32_0 : i32, i32
  }
  func.func @transform_3(%arg0: i32) -> (i32, i32) {
    %c0_i32 = arith.constant 0 : i32
    %c0_i32_0 = arith.constant 0 : i32
    %c0_i32_1 = arith.constant 0 : i32
    return %c0_i32, %c0_i32_0 : i32, i32
  }
  func.func @transform_4(%arg0: i32) -> (i32, i32) {
    %c0_i32 = arith.constant 0 : i32
    %c0_i32_0 = arith.constant 0 : i32
    %c0_i32_1 = arith.constant 0 : i32
    return %c0_i32, %c0_i32_0 : i32, i32
  }
  func.func @transform_5(%arg0: i32) -> (i32, i32) {
    %c0_i32 = arith.constant 0 : i32
    %c0_i32_0 = arith.constant 0 : i32
    %c0_i32_1 = arith.constant 0 : i32
    return %c0_i32, %c0_i32_0 : i32, i32
  }
  func.func @transform_6(%arg0: i32) -> (i32, i32) {
    %c0_i32 = arith.constant 0 : i32
    %c0_i32_0 = arith.constant 0 : i32
    %c0_i32_1 = arith.constant 0 : i32
    return %c0_i32, %c0_i32_0 : i32, i32
  }
  func.func @transform_7(%arg0: i32) -> (i32, i32) {
    %c0_i32 = arith.constant 0 : i32
    %c0_i32_0 = arith.constant 0 : i32
    %c0_i32_1 = arith.constant 0 : i32
    return %c0_i32, %c0_i32_0 : i32, i32
  }
}

</mosaic_0001>

<llo_original>
// kernel: bgb_gcn_forward.5
$region0: #{bgb_gcn_forward.5}
  #allocation0 [shape = 'u32[]', space=smem, size = 0x4, offset = 0x4, fixed_abs, tag = 'smem constant byte address 0x4 - core index']
  #allocation1 [shape = 'u32[144,128]{1,0:T(1,128)}', space=vmem, size = 0x12000, scoped, tag = 'internal scratch']
  %s0 = inlined_call_operand.vmem [shape: bf16[256,128], index: 0, kind: input, shape index: {}]
  %s1 = inlined_call_operand.vmem [shape: f32[256,1], index: 1, kind: input, shape index: {}]
  %s2 = inlined_call_operand.vmem [shape: bf16[128,256], index: 2, kind: input, shape index: {}]
  %s3 = inlined_call_operand.vmem [shape: f32[1,256], index: 3, kind: input, shape index: {}]
  %s4 = inlined_call_operand.vmem [shape: bf16[256,256], index: 4, kind: output, shape index: {}]
  %s5 = sld [smem:[#allocation0]]
  $region49: #{bgb_gcn_forward.5} parent=0
    _
  %s7 = ssub.s32 1, %s5
  %s8 = scalar_select 0, %s7, %s5
  loop: start=0, step=1, limit=4
  $region2: #{bgb_gcn_forward.5} parent=0 // loop_pre_header
    _
  $region3: #{bgb_gcn_forward.5} parent=0 // loop_header
    %s10 = sphi 0, %s14
    %p11 = scmp.ge.s32.totalorder %s10, 4
    %s20 = sphi 0, %s22
    %s23 = sphi 0, %s20
    %s24 = sphi 0, %s23
    %s40 = sphi 0, %s24
    %s46 = sphi 0, %s48
    %s49 = sphi 0, %s46
    %s50 = sphi 0, %s49
    %s66 = sphi 0, %s50
    %s70 = sphi 0, %s70
    %s72 = sphi 0, %s70
    %s73 = sphi 0, %s72
    %s87 = sphi 0, %s73
    %s91 = sphi 0, %s91
    %s93 = sphi 0, %s91
    %s94 = sphi 0, %s93
    %s108 = sphi 0, %s94
    %s114 = sphi 0, %s116
    %s117 = sphi 0, %s114
    %s118 = sphi 0, %s117
    %s134 = sphi 0, %s118
  $region4: #{bgb_gcn_forward.5} parent=0 // loop_header_branch
    %13 = sbr.rel (%p11) target = $region8
  $region5: #{bgb_gcn_forward.5} parent=0 // loop_body
    %s15 = ssub.s32 %s10, 1
    %s16 = ssub.s32 %s10, 2
    %s17 = sadd.s32 %s10, 1
    %s18 = ssub.s32 %s10, %s17
    %p19 = scmp.eq.s32.totalorder %s18, 0
    %s21 = sadd.s32 %s20, 1
    %s22 = scalar_select %p19, %s20, %s21
    %p25 = pneg %p19
    %p26 = scmp.eq.s32.totalorder %s10, 1
    %p27 = por %p25, %p26
    %p28 = scmp.ne.s32.totalorder %s20, %s23
    %p29 = scmp.eq.s32.totalorder %s10, 0
    %p30 = por %p28, %p29
    %p31 = scmp.ne.s32.totalorder %s20, %s23
    %p32 = scmp.eq.s32.totalorder %s15, 1
    %p33 = por %p31, %p32
    %p34 = scmp.ne.s32.totalorder %s23, %s24
    %p35 = scmp.eq.s32.totalorder %s15, 0
    %p36 = por %p34, %p35
    %p37 = scmp.ne.s32.totalorder %s23, %s24
    %p38 = scmp.eq.s32.totalorder %s16, 1
    %p39 = por %p37, %p38
    %p41 = scmp.ne.s32.totalorder %s24, %s40
    %p42 = scmp.eq.s32.totalorder %s16, 0
    %p43 = por %p41, %p42
    %s44 = ssub.s32 %s10, %s17
    %p45 = scmp.eq.s32.totalorder %s44, 0
    %s47 = sadd.s32 %s46, 1
    %s48 = scalar_select %p45, %s46, %s47
    %p51 = pneg %p45
    %p52 = scmp.eq.s32.totalorder %s10, 1
    %p53 = por %p51, %p52
    %p54 = scmp.ne.s32.totalorder %s46, %s49
    %p55 = scmp.eq.s32.totalorder %s10, 0
    %p56 = por %p54, %p55
    %p57 = scmp.ne.s32.totalorder %s46, %s49
    %p58 = scmp.eq.s32.totalorder %s15, 1
    %p59 = por %p57, %p58
    %p60 = scmp.ne.s32.totalorder %s49, %s50
    %p61 = scmp.eq.s32.totalorder %s15, 0
    %p62 = por %p60, %p61
    %p63 = scmp.ne.s32.totalorder %s49, %s50
    %p64 = scmp.eq.s32.totalorder %s16, 1
    %p65 = por %p63, %p64
    %p67 = scmp.ne.s32.totalorder %s50, %s66
    %p68 = scmp.eq.s32.totalorder %s16, 0
    %p69 = por %p67, %p68
    %s71 = sadd.s32 %s70, 1
    %p74 = scmp.eq.s32.totalorder %s10, 1
    %p75 = scmp.ne.s32.totalorder %s70, %s72
    %p76 = scmp.eq.s32.totalorder %s10, 0
    %p77 = por %p75, %p76
    %p78 = scmp.ne.s32.totalorder %s70, %s72
    %p79 = scmp.eq.s32.totalorder %s15, 1
    %p80 = por %p78, %p79
    %p81 = scmp.ne.s32.totalorder %s72, %s73
    %p82 = scmp.eq.s32.totalorder %s15, 0
    %p83 = por %p81, %p82
    %p84 = scmp.ne.s32.totalorder %s72, %s73
    %p85 = scmp.eq.s32.totalorder %s16, 1
    %p86 = por %p84, %p85
    %p88 = scmp.ne.s32.totalorder %s73, %s87
    %p89 = scmp.eq.s32.totalorder %s16, 0
    %p90 = por %p88, %p89
    %s92 = sadd.s32 %s91, 1
    %p95 = scmp.eq.s32.totalorder %s10, 1
    %p96 = scmp.ne.s32.totalorder %s91, %s93
    %p97 = scmp.eq.s32.totalorder %s10, 0
    %p98 = por %p96, %p97
    %p99 = scmp.ne.s32.totalorder %s91, %s93
    %p100 = scmp.eq.s32.totalorder %s15, 1
    %p101 = por %p99, %p100
    %p102 = scmp.ne.s32.totalorder %s93, %s94
    %p103 = scmp.eq.s32.totalorder %s15, 0
    %p104 = por %p102, %p103
    %p105 = scmp.ne.s32.totalorder %s93, %s94
    %p106 = scmp.eq.s32.totalorder %s16, 1
    %p107 = por %p105, %p106
    %p109 = scmp.ne.s32.totalorder %s94, %s108
    %p110 = scmp.eq.s32.totalorder %s16, 0
    %p111 = por %p109, %p110
    %s112 = ssub.s32 %s10, %s17
    %p113 = scmp.eq.s32.totalorder %s112, 0
    %s115 = sadd.s32 %s114, 1
    %s116 = scalar_select %p113, %s114, %s115
    %p119 = pneg %p113
    %p120 = scmp.eq.s32.totalorder %s10, 1
    %p121 = por %p119, %p120
    %p122 = scmp.ne.s32.totalorder %s114, %s117
    %p123 = scmp.eq.s32.totalorder %s10, 0
    %p124 = por %p122, %p123
    %p125 = scmp.ne.s32.totalorder %s114, %s117
    %p126 = scmp.eq.s32.totalorder %s15, 1
    %p127 = por %p125, %p126
    %p128 = scmp.ne.s32.totalorder %s117, %s118
    %p129 = scmp.eq.s32.totalorder %s15, 0
    %p130 = por %p128, %p129
    %p131 = scmp.ne.s32.totalorder %s117, %s118
    %p132 = scmp.eq.s32.totalorder %s16, 1
    %p133 = por %p131, %p132
    %p135 = scmp.ne.s32.totalorder %s118, %s134
    %p136 = scmp.eq.s32.totalorder %s16, 0
    %p137 = por %p135, %p136
    %p138 = scmp.le.s32.totalorder 1, %s10
    %p139 = scmp.lt.s32.totalorder %s10, 3
    %p140 = pnand %p138, %p139
    %p141 = pneg %p140
    // Predicated region
    $region9: #{bgb_gcn_forward.5} parent=5 // pred_check
      _
    $region10: #{bgb_gcn_forward.5} parent=5 // pred_check_branch
      %143 = sbr.rel (%p140) target = $region12
    $region11: #{bgb_gcn_forward.5} parent=5 // pred_region
      %s144 = ssub.s32 %s10, 1
      // Predicated region
      $region13: #{bgb_gcn_forward.5} parent=11 // pred_check
        %p145 = pneg %p83
      $region14: #{bgb_gcn_forward.5} parent=11 // pred_check_branch
        %147 = sbr.rel (%p145) target = $region16
      $region15: #{bgb_gcn_forward.5} parent=11 // pred_region
        _
      $region16: #{bgb_gcn_forward.5} parent=11 // pred_fallthru
        _
      // Predicated region
      $region17: #{bgb_gcn_forward.5} parent=11 // pred_check
        %p148 = pneg %p104
      $region18: #{bgb_gcn_forward.5} parent=11 // pred_check_branch
        %150 = sbr.rel (%p148) target = $region20
      $region19: #{bgb_gcn_forward.5} parent=11 // pred_region
        _
      $region20: #{bgb_gcn_forward.5} parent=11 // pred_fallthru
        _
    $region12: #{bgb_gcn_forward.5} parent=5 // pred_fallthru
      _
    %p151 = scmp.lt.s32.totalorder %s10, 2
    // Predicated region
    $region21: #{bgb_gcn_forward.5} parent=5 // pred_check
      %p152 = pneg %p151
    $region22: #{bgb_gcn_forward.5} parent=5 // pred_check_branch
      %154 = sbr.rel (%p152) target = $region24
    $region23: #{bgb_gcn_forward.5} parent=5 // pred_region
      // Predicated region
      $region25: #{bgb_gcn_forward.5} parent=23 // pred_check
        %p155 = pneg %p30
      $region26: #{bgb_gcn_forward.5} parent=23 // pred_check_branch
        %157 = sbr.rel (%p155) target = $region28
      $region27: #{bgb_gcn_forward.5} parent=23 // pred_region
        %s158 = smul.u32 16, %s10
        %p159 = scmp.lt.s32.totalorder %s158, 31
        %s160 = scalar_select %p159, %s158, 31
        %s161 = smul.addr %s160, 4
        %s162 = scalar_lea.vmem %s0, %s161
        %s163 = smul.u32 16, %s10
      $region28: #{bgb_gcn_forward.5} parent=23 // pred_fallthru
        _
      // Predicated region
      $region29: #{bgb_gcn_forward.5} parent=23 // pred_check
        %p164 = pneg %p56
      $region30: #{bgb_gcn_forward.5} parent=23 // pred_check_branch
        %166 = sbr.rel (%p164) target = $region32
      $region31: #{bgb_gcn_forward.5} parent=23 // pred_region
        %s167 = smul.u32 16, %s10
        %p168 = scmp.lt.s32.totalorder %s167, 31
        %s169 = scalar_select %p168, %s167, 31
        %s170 = smul.addr %s169, 8
        %s171 = scalar_lea.vmem %s1, %s170
        %s172 = smul.u32 16, %s10
      $region32: #{bgb_gcn_forward.5} parent=23 // pred_fallthru
        _
    $region24: #{bgb_gcn_forward.5} parent=5 // pred_fallthru
      _
    %p173 = scmp.le.s32.totalorder 1, %s10
    %p174 = scmp.lt.s32.totalorder %s10, 3
    %p175 = pnand %p173, %p174
    %p176 = pneg %p175
    // Predicated region
    $region33: #{bgb_gcn_forward.5} parent=5 // pred_check
      _
    $region34: #{bgb_gcn_forward.5} parent=5 // pred_check_branch
      %178 = sbr.rel (%p175) target = $region36
    $region35: #{bgb_gcn_forward.5} parent=5 // pred_region
      %s179 = ssub.s32 %s10, 1
      %s180 = smul.u32 16, %s15
      %p181 = scmp.lt.s32.totalorder %s180, 31
      %s182 = scalar_select %p181, %s180, 31
      %s183 = smul.addr %s182, 4
      %s184 = scalar_lea.vmem %s0, %s183
      %p185 = pneg %p36
      %p186 = pneg %p33
      %s187 = smul.u32 16, %s15
      %p188 = scmp.lt.s32.totalorder %s187, 31
      %s189 = scalar_select %p188, %s187, 31
      %s190 = smul.addr %s189, 8
      %s191 = scalar_lea.vmem %s1, %s190
      %p192 = pneg %p62
      %p193 = pneg %p59
      %p194 = pneg %p83
      %p195 = pneg %p80
      %p196 = pneg %p104
      %p197 = pneg %p101
      %p198 = pneg %p130
      %p199 = pneg %p127
      %s200 = smul.u32 16, %s15
      %p201 = scmp.lt.s32.totalorder %s200, 31
      %s202 = scalar_select %p201, %s200, 31
      %s203 = smul.addr %s202, 2
      %s204 = smul.addr %s203, 4
      %s205 = scalar_lea.vmem %s4, %s204
      %s206 = smul.u32 16, %s15
      %p207 = scmp.lt.s32.totalorder %s206, 31
      %s208 = scalar_select %p207, %s206, 31
      %s209 = smul.addr %s208, 4
      %s210 = scalar_lea.vmem %s0, %s209
      %s211 = smul.u32 16, %s15
      %s212 = smul.u32 16, %s15
      %p213 = scmp.lt.s32.totalorder %s212, 31
      %s214 = scalar_select %p213, %s212, 31
      %s215 = smul.addr %s214, 8
      %s216 = scalar_lea.vmem %s1, %s215
      %s217 = smul.u32 16, %s15
      %s218 = smul.u32 16, %s15
      %p219 = scmp.lt.s32.totalorder %s218, 31
      %s220 = scalar_select %p219, %s218, 31
      %s221 = smul.addr %s220, 2
      %s222 = smul.addr %s221, 4
      %s223 = scalar_lea.vmem %s4, %s222
      %s224 = smul.u32 16, %s15
      %v226 = vld [vmem:[%s210] sm:$0xf]
      %v227 = vld [vmem:[%s210 + $0x4] sm:$0xf]
      %v228 = vld [vmem:[%s210 + $0x8] sm:$0xf]
      %v229 = vld [vmem:[%s210 + $0xc] sm:$0xf]
      %v230 = vld [vmem:[%s210 + $0x10] sm:$0xf]
      %v231 = vld [vmem:[%s210 + $0x14] sm:$0xf]
      %v232 = vld [vmem:[%s210 + $0x18] sm:$0xf]
      %v233 = vld [vmem:[%s210 + $0x1c] sm:$0xf]
      %v234 = vld [vmem:[%s210 + $0x20] sm:$0xf]
      %v235 = vld [vmem:[%s210 + $0x24] sm:$0xf]
      %v236 = vld [vmem:[%s210 + $0x28] sm:$0xf]
      %v237 = vld [vmem:[%s210 + $0x2c] sm:$0xf]
      %v238 = vld [vmem:[%s210 + $0x30] sm:$0xf]
      %v239 = vld [vmem:[%s210 + $0x34] sm:$0xf]
      %v240 = vld [vmem:[%s210 + $0x38] sm:$0xf]
      %v241 = vld [vmem:[%s210 + $0x3c] sm:$0xf]
      %v242 = vld [vmem:[%s2] sm:$0xff]
      %v243 = vld [vmem:[%s2 + $0x8] sm:$0xff]
      %v244 = vld [vmem:[%s2 + $0x10] sm:$0xff]
      %v245 = vld [vmem:[%s2 + $0x18] sm:$0xff]
      %v246 = vld [vmem:[%s2 + $0x20] sm:$0xff]
      %v247 = vld [vmem:[%s2 + $0x28] sm:$0xff]
      %v248 = vld [vmem:[%s2 + $0x30] sm:$0xff]
      %v249 = vld [vmem:[%s2 + $0x38] sm:$0xff]
      %v250 = vld [vmem:[%s2 + $0x40] sm:$0xff]
      %v251 = vld [vmem:[%s2 + $0x48] sm:$0xff]
      %v252 = vld [vmem:[%s2 + $0x50] sm:$0xff]
      %v253 = vld [vmem:[%s2 + $0x58] sm:$0xff]
      %v254 = vld [vmem:[%s2 + $0x60] sm:$0xff]
      %v255 = vld [vmem:[%s2 + $0x68] sm:$0xff]
      %v256 = vld [vmem:[%s2 + $0x70] sm:$0xff]
      %v257 = vld [vmem:[%s2 + $0x78] sm:$0xff]
      %v258 = vlaneseq
      %v259 = vand.u32 %v258, 127
      %v260 = vadd.s32 %v259, 128
      %vm261 = vcmp.lt.s32.totalorder %v259, 128
      %vm262 = vcmp.lt.s32.totalorder %v260, 128
      %v263 = vld [vmem:[%s216] sm:$0xff]
      %v264 = vld [vmem:[%s216 + $0x8] sm:$0xff]
      %v265 = vld [vmem:[%s216 + $0x10] sm:$0xff]
      %v266 = vld [vmem:[%s216 + $0x18] sm:$0xff]
      %v267 = vld [vmem:[%s216 + $0x20] sm:$0xff]
      %v268 = vld [vmem:[%s216 + $0x28] sm:$0xff]
      %v269 = vld [vmem:[%s216 + $0x30] sm:$0xff]
      %v270 = vld [vmem:[%s216 + $0x38] sm:$0xff]
      %v271 = vld [vmem:[%s216 + $0x40] sm:$0xff]
      %v272 = vld [vmem:[%s216 + $0x48] sm:$0xff]
      %v273 = vld [vmem:[%s216 + $0x50] sm:$0xff]
      %v274 = vld [vmem:[%s216 + $0x58] sm:$0xff]
      %v275 = vld [vmem:[%s216 + $0x60] sm:$0xff]
      %v276 = vld [vmem:[%s216 + $0x68] sm:$0xff]
      %v277 = vld [vmem:[%s216 + $0x70] sm:$0xff]
      %v278 = vld [vmem:[%s216 + $0x78] sm:$0xff]
      %280 = vset.pattern.permute.xlu0 0
      %281 = vperm.xlu0 %280, %v263
      %v282 = vpop.permute.xlu0 %281
      %285 = vset.pattern.permute.xlu0 0
      %286 = vperm.xlu0 %285, %v264
      %v287 = vpop.permute.xlu0 %286
      %290 = vset.pattern.permute.xlu0 0
      %291 = vperm.xlu0 %290, %v265
      %v292 = vpop.permute.xlu0 %291
      %295 = vset.pattern.permute.xlu0 0
      %296 = vperm.xlu0 %295, %v266
      %v297 = vpop.permute.xlu0 %296
      %300 = vset.pattern.permute.xlu0 0
      %301 = vperm.xlu0 %300, %v267
      %v302 = vpop.permute.xlu0 %301
      %305 = vset.pattern.permute.xlu0 0
      %306 = vperm.xlu0 %305, %v268
      %v307 = vpop.permute.xlu0 %306
      %310 = vset.pattern.permute.xlu0 0
      %311 = vperm.xlu0 %310, %v269
      %v312 = vpop.permute.xlu0 %311
      %315 = vset.pattern.permute.xlu0 0
      %316 = vperm.xlu0 %315, %v270
      %v317 = vpop.permute.xlu0 %316
      %320 = vset.pattern.permute.xlu0 0
      %321 = vperm.xlu0 %320, %v271
      %v322 = vpop.permute.xlu0 %321
      %325 = vset.pattern.permute.xlu0 0
      %326 = vperm.xlu0 %325, %v272
      %v327 = vpop.permute.xlu0 %326
      %330 = vset.pattern.permute.xlu0 0
      %331 = vperm.xlu0 %330, %v273
      %v332 = vpop.permute.xlu0 %331
      %335 = vset.pattern.permute.xlu0 0
      %336 = vperm.xlu0 %335, %v274
      %v337 = vpop.permute.xlu0 %336
      %340 = vset.pattern.permute.xlu0 0
      %341 = vperm.xlu0 %340, %v275
      %v342 = vpop.permute.xlu0 %341
      %345 = vset.pattern.permute.xlu0 0
      %346 = vperm.xlu0 %345, %v276
      %v347 = vpop.permute.xlu0 %346
      %350 = vset.pattern.permute.xlu0 0
      %351 = vperm.xlu0 %350, %v277
      %v352 = vpop.permute.xlu0 %351
      %355 = vset.pattern.permute.xlu0 0
      %356 = vperm.xlu0 %355, %v278
      %v357 = vpop.permute.xlu0 %356
      %v359 = vsel %vm261, %v282, 1.0
      %v360 = vsel %vm262, %v282, 1.0
      %v361 = vsel %vm261, %v287, 1.0
      %v362 = vsel %vm262, %v287, 1.0
      %v363 = vsel %vm261, %v292, 1.0
      %v364 = vsel %vm262, %v292, 1.0
      %v365 = vsel %vm261, %v297, 1.0
      %v366 = vsel %vm262, %v297, 1.0
      %v367 = vsel %vm261, %v302, 1.0
      %v368 = vsel %vm262, %v302, 1.0
      %v369 = vsel %vm261, %v307, 1.0
      %v370 = vsel %vm262, %v307, 1.0
      %v371 = vsel %vm261, %v312, 1.0
      %v372 = vsel %vm262, %v312, 1.0
      %v373 = vsel %vm261, %v317, 1.0
      %v374 = vsel %vm262, %v317, 1.0
      %v375 = vsel %vm261, %v322, 1.0
      %v376 = vsel %vm262, %v322, 1.0
      %v377 = vsel %vm261, %v327, 1.0
      %v378 = vsel %vm262, %v327, 1.0
      %v379 = vsel %vm261, %v332, 1.0
      %v380 = vsel %vm262, %v332, 1.0
      %v381 = vsel %vm261, %v337, 1.0
      %v382 = vsel %vm262, %v337, 1.0
      %v383 = vsel %vm261, %v342, 1.0
      %v384 = vsel %vm262, %v342, 1.0
      %v385 = vsel %vm261, %v347, 1.0
      %v386 = vsel %vm262, %v347, 1.0
      %v387 = vsel %vm261, %v352, 1.0
      %v388 = vsel %vm262, %v352, 1.0
      %v389 = vsel %vm261, %v357, 1.0
      %v390 = vsel %vm262, %v357, 1.0
      %v391 = vld [vmem:[%s3] sm:$0x3]
      %v393 = vlaneseq
      %v394 = vshrl.u32 %v393, 7
      %v395 = vsub.s32 0, %v394
      %v396 = vrot.slane %v391, %v395
      %v397 = vlaneseq
      %v398 = vshrl.u32 %v397, 7
      %v399 = vsub.s32 1, %v398
      %v400 = vrot.slane %v391, %v399
      %v419 = vunpack.c.l.b16 %v226
      %v420 = vunpack.c.l.b16 %v227
      %v421 = vunpack.c.l.b16 %v228
      %v422 = vunpack.c.l.b16 %v229
      %v423 = vunpack.c.l.b16 %v230
      %v424 = vunpack.c.l.b16 %v231
      %v425 = vunpack.c.l.b16 %v232
      %v426 = vunpack.c.l.b16 %v233
      %v427 = vunpack.c.l.b16 %v234
      %v428 = vunpack.c.l.b16 %v235
      %v429 = vunpack.c.l.b16 %v236
      %v430 = vunpack.c.l.b16 %v237
      %v431 = vunpack.c.l.b16 %v238
      %v432 = vunpack.c.l.b16 %v239
      %v433 = vunpack.c.l.b16 %v240
      %v434 = vunpack.c.l.b16 %v241
      %v435 = vpack.c.b16 %v420, %v419
      %v436 = vpack.c.b16 %v422, %v421
      %v437 = vpack.c.b16 %v424, %v423
      %v438 = vpack.c.b16 %v426, %v425
      %v439 = vpack.c.b16 %v428, %v427
      %v440 = vpack.c.b16 %v430, %v429
      %v441 = vpack.c.b16 %v432, %v431
      %v442 = vpack.c.b16 %v434, %v433
      %v467 = vunpack.c.l.b16 %v242
      %v468 = vunpack.c.h.b16 %v242
      %v469 = vunpack.c.l.b16 %v243
      %v470 = vunpack.c.h.b16 %v243
      %v471 = vunpack.c.l.b16 %v244
      %v472 = vunpack.c.h.b16 %v244
      %v473 = vunpack.c.l.b16 %v245
      %v474 = vunpack.c.h.b16 %v245
      %v475 = vunpack.c.l.b16 %v246
      %v476 = vunpack.c.h.b16 %v246
      %v477 = vunpack.c.l.b16 %v247
      %v478 = vunpack.c.h.b16 %v247
      %v479 = vunpack.c.l.b16 %v248
      %v480 = vunpack.c.h.b16 %v248
      %v481 = vunpack.c.l.b16 %v249
      %v482 = vunpack.c.h.b16 %v249
      %v483 = vunpack.c.l.b16 %v250
      %v484 = vunpack.c.h.b16 %v250
      %v485 = vunpack.c.l.b16 %v251
      %v486 = vunpack.c.h.b16 %v251
      %v487 = vunpack.c.l.b16 %v252
      %v488 = vunpack.c.h.b16 %v252
      %v489 = vunpack.c.l.b16 %v253
      %v490 = vunpack.c.h.b16 %v253
      %v491 = vunpack.c.l.b16 %v254
      %v492 = vunpack.c.h.b16 %v254
      %v493 = vunpack.c.l.b16 %v255
      %v494 = vunpack.c.h.b16 %v255
      %v495 = vunpack.c.l.b16 %v256
      %v496 = vunpack.c.h.b16 %v256
      %v497 = vunpack.c.l.b16 %v257
      %v498 = vunpack.c.h.b16 %v257
      %v499 = vpack.c.b16 %v469, %v467
      %v500 = vpack.c.b16 %v470, %v468
      %v501 = vpack.c.b16 %v473, %v471
      %v502 = vpack.c.b16 %v474, %v472
      %v503 = vpack.c.b16 %v477, %v475
      %v504 = vpack.c.b16 %v478, %v476
      %v505 = vpack.c.b16 %v481, %v479
      %v506 = vpack.c.b16 %v482, %v480
      %v507 = vpack.c.b16 %v485, %v483
      %v508 = vpack.c.b16 %v486, %v484
      %v509 = vpack.c.b16 %v489, %v487
      %v510 = vpack.c.b16 %v490, %v488
      %v511 = vpack.c.b16 %v493, %v491
      %v512 = vpack.c.b16 %v494, %v492
      %v513 = vpack.c.b16 %v497, %v495
      %v514 = vpack.c.b16 %v498, %v496
      %531 = vmatprep.subr.bf16.mxu0 %v500
      %532 = vmatpush1.bf16.msra.mxu0 %v499
      %533 = vmatprep.subr.bf16.mxu0 %v502
      %534 = vmatpush1.bf16.msra.mxu0 %v501
      %535 = vmatprep.subr.bf16.mxu0 %v504
      %536 = vmatpush1.bf16.msra.mxu0 %v503
      %537 = vmatprep.subr.bf16.mxu0 %v506
      %538 = vmatpush1.bf16.msra.mxu0 %v505
      %539 = vmatprep.subr.bf16.mxu0 %v508
      %540 = vmatpush1.bf16.msra.mxu0 %v507
      %541 = vmatprep.subr.bf16.mxu0 %v510
      %542 = vmatpush1.bf16.msra.mxu0 %v509
      %543 = vmatprep.subr.bf16.mxu0 %v512
      %544 = vmatpush1.bf16.msra.mxu0 %v511
      %545 = vmatprep.subr.bf16.mxu0 %v514
      %546 = vmatpush1.bf16.msra.mxu0 %v513
      %547 = vmatprep.subr.bf16.mxu0 0
      %548 = vmatpush1.bf16.msra.mxu0 0
      %549 = vmatprep.subr.bf16.mxu0 0
      %550 = vmatpush1.bf16.msra.mxu0 0
      %551 = vmatprep.subr.bf16.mxu0 0
      %552 = vmatpush1.bf16.msra.mxu0 0
      %553 = vmatprep.subr.bf16.mxu0 0
      %554 = vmatpush1.bf16.msra.mxu0 0
      %555 = vmatprep.subr.bf16.mxu0 0
      %556 = vmatpush1.bf16.msra.mxu0 0
      %557 = vmatprep.subr.bf16.mxu0 0
      %558 = vmatpush1.bf16.msra.mxu0 0
      %559 = vmatprep.subr.bf16.mxu0 0
      %560 = vmatpush1.bf16.msra.mxu0 0
      %561 = vmatprep.subr.bf16.mxu0 0
      %562 = vmatpush1.bf16.msra.mxu0 0
      %563 = vmatprep.mubr.bf16.mxu0 0
      %564 = vmatmul.mubr.bf16.gmra.mrb[0].mxu0 %v435
      %v565 = vpop.f32.mrb[0].mxu0
      %v566 = vadd.f32 %v396, %v565
      %v567 = vpop.f32.mrb[0].mxu0
      %v568 = vadd.f32 %v400, %v567
      %v569 = vpop.f32.mrb[0].mxu0
      %v570 = vadd.f32 %v396, %v569
      %v571 = vpop.f32.mrb[0].mxu0
      %v572 = vadd.f32 %v400, %v571
      %573 = vmatprep.mubr.bf16.mxu0 0
      %574 = vmatmul.mubr.bf16.gmra.mrb[0].mxu0 %v436
      %v575 = vpop.f32.mrb[0].mxu0
      %v576 = vadd.f32 %v396, %v575
      %v577 = vpop.f32.mrb[0].mxu0
      %v578 = vadd.f32 %v400, %v577
      %v579 = vpop.f32.mrb[0].mxu0
      %v580 = vadd.f32 %v396, %v579
      %v581 = vpop.f32.mrb[0].mxu0
      %v582 = vadd.f32 %v400, %v581
      %583 = vmatprep.mubr.bf16.mxu0 0
      %584 = vmatmul.mubr.bf16.gmra.mrb[0].mxu0 %v437
      %v585 = vpop.f32.mrb[0].mxu0
      %v586 = vadd.f32 %v396, %v585
      %v587 = vpop.f32.mrb[0].mxu0
      %v588 = vadd.f32 %v400, %v587
      %v589 = vpop.f32.mrb[0].mxu0
      %v590 = vadd.f32 %v396, %v589
      %v591 = vpop.f32.mrb[0].mxu0
      %v592 = vadd.f32 %v400, %v591
      %593 = vmatprep.mubr.bf16.mxu0 0
      %594 = vmatmul.mubr.bf16.gmra.mrb[0].mxu0 %v438
      %v595 = vpop.f32.mrb[0].mxu0
      %v596 = vadd.f32 %v396, %v595
      %v597 = vpop.f32.mrb[0].mxu0
      %v598 = vadd.f32 %v400, %v597
      %v599 = vpop.f32.mrb[0].mxu0
      %v600 = vadd.f32 %v396, %v599
      %v601 = vpop.f32.mrb[0].mxu0
      %v602 = vadd.f32 %v400, %v601
      %603 = vmatprep.mubr.bf16.mxu0 0
      %604 = vmatmul.mubr.bf16.gmra.mrb[0].mxu0 %v439
      %v605 = vpop.f32.mrb[0].mxu0
      %v606 = vadd.f32 %v396, %v605
      %v607 = vpop.f32.mrb[0].mxu0
      %v608 = vadd.f32 %v400, %v607
      %v609 = vpop.f32.mrb[0].mxu0
      %v610 = vadd.f32 %v396, %v609
      %v611 = vpop.f32.mrb[0].mxu0
      %v612 = vadd.f32 %v400, %v611
      %613 = vmatprep.mubr.bf16.mxu0 0
      %614 = vmatmul.mubr.bf16.gmra.mrb[0].mxu0 %v440
      %v615 = vpop.f32.mrb[0].mxu0
      %v616 = vadd.f32 %v396, %v615
      %v617 = vpop.f32.mrb[0].mxu0
      %v618 = vadd.f32 %v400, %v617
      %v619 = vpop.f32.mrb[0].mxu0
      %v620 = vadd.f32 %v396, %v619
      %v621 = vpop.f32.mrb[0].mxu0
      %v622 = vadd.f32 %v400, %v621
      %623 = vmatprep.mubr.bf16.mxu0 0
      %624 = vmatmul.mubr.bf16.gmra.mrb[0].mxu0 %v441
      %v625 = vpop.f32.mrb[0].mxu0
      %v626 = vadd.f32 %v396, %v625
      %v627 = vpop.f32.mrb[0].mxu0
      %v628 = vadd.f32 %v400, %v627
      %v629 = vpop.f32.mrb[0].mxu0
      %v630 = vadd.f32 %v396, %v629
      %v631 = vpop.f32.mrb[0].mxu0
      %v632 = vadd.f32 %v400, %v631
      %633 = vmatprep.mubr.bf16.mxu0 0
      %634 = vmatmul.mubr.bf16.gmra.mrb[0].mxu0 %v442
      %v635 = vpop.f32.mrb[0].mxu0
      %v636 = vadd.f32 %v396, %v635
      %v637 = vpop.f32.mrb[0].mxu0
      %v638 = vadd.f32 %v400, %v637
      %v639 = vpop.f32.mrb[0].mxu0
      %v640 = vadd.f32 %v396, %v639
      %v641 = vpop.f32.mrb[0].mxu0
      %v642 = vadd.f32 %v400, %v641
      %643 = vdwg.mxu0
      %v644 = vmul.f32 %v566, %v359
      %v645 = vmul.f32 %v568, %v360
      %v646 = vmul.f32 %v570, %v361
      %v647 = vmul.f32 %v572, %v362
      %v648 = vmul.f32 %v576, %v363
      %v649 = vmul.f32 %v578, %v364
      %v650 = vmul.f32 %v580, %v365
      %v651 = vmul.f32 %v582, %v366
      %v652 = vmul.f32 %v586, %v367
      %v653 = vmul.f32 %v588, %v368
      %v654 = vmul.f32 %v590, %v369
      %v655 = vmul.f32 %v592, %v370
      %v656 = vmul.f32 %v596, %v371
      %v657 = vmul.f32 %v598, %v372
      %v658 = vmul.f32 %v600, %v373
      %v659 = vmul.f32 %v602, %v374
      %v660 = vmul.f32 %v606, %v375
      %v661 = vmul.f32 %v608, %v376
      %v662 = vmul.f32 %v610, %v377
      %v663 = vmul.f32 %v612, %v378
      %v664 = vmul.f32 %v616, %v379
      %v665 = vmul.f32 %v618, %v380
      %v666 = vmul.f32 %v620, %v381
      %v667 = vmul.f32 %v622, %v382
      %v668 = vmul.f32 %v626, %v383
      %v669 = vmul.f32 %v628, %v384
      %v670 = vmul.f32 %v630, %v385
      %v671 = vmul.f32 %v632, %v386
      %v672 = vmul.f32 %v636, %v387
      %v673 = vmul.f32 %v638, %v388
      %v674 = vmul.f32 %v640, %v389
      %v675 = vmul.f32 %v642, %v390
      %v676 = vpack.c.bf16 %v646, %v644
      %v677 = vpack.c.bf16 %v647, %v645
      %v678 = vpack.c.bf16 %v650, %v648
      %v679 = vpack.c.bf16 %v651, %v649
      %v680 = vpack.c.bf16 %v654, %v652
      %v681 = vpack.c.bf16 %v655, %v653
      %v682 = vpack.c.bf16 %v658, %v656
      %v683 = vpack.c.bf16 %v659, %v657
      %v684 = vpack.c.bf16 %v662, %v660
      %v685 = vpack.c.bf16 %v663, %v661
      %v686 = vpack.c.bf16 %v666, %v664
      %v687 = vpack.c.bf16 %v667, %v665
      %v688 = vpack.c.bf16 %v670, %v668
      %v689 = vpack.c.bf16 %v671, %v669
      %v690 = vpack.c.bf16 %v674, %v672
      %v691 = vpack.c.bf16 %v675, %v673
      %v708 = vunpack.c.l.b16 %v676
      %v709 = vunpack.c.l.b16 %v677
      %v710 = vunpack.c.h.b16 %v676
      %v711 = vunpack.c.h.b16 %v677
      %v712 = vunpack.c.l.b16 %v678
      %v713 = vunpack.c.l.b16 %v679
      %v714 = vunpack.c.h.b16 %v678
      %v715 = vunpack.c.h.b16 %v679
      %v716 = vunpack.c.l.b16 %v680
      %v717 = vunpack.c.l.b16 %v681
      %v718 = vunpack.c.h.b16 %v680
      %v719 = vunpack.c.h.b16 %v681
      %v720 = vunpack.c.l.b16 %v682
      %v721 = vunpack.c.l.b16 %v683
      %v722 = vunpack.c.h.b16 %v682
      %v723 = vunpack.c.h.b16 %v683
      %v724 = vunpack.c.l.b16 %v684
      %v725 = vunpack.c.l.b16 %v685
      %v726 = vunpack.c.h.b16 %v684
      %v727 = vunpack.c.h.b16 %v685
      %v728 = vunpack.c.l.b16 %v686
      %v729 = vunpack.c.l.b16 %v687
      %v730 = vunpack.c.h.b16 %v686
      %v731 = vunpack.c.h.b16 %v687
      %v732 = vunpack.c.l.b16 %v688
      %v733 = vunpack.c.l.b16 %v689
      %v734 = vunpack.c.h.b16 %v688
      %v735 = vunpack.c.h.b16 %v689
      %v736 = vunpack.c.l.b16 %v690
      %v737 = vunpack.c.l.b16 %v691
      %v738 = vunpack.c.h.b16 %v690
      %v739 = vunpack.c.h.b16 %v691
      %v740 = vpack.c.b16 %v709, %v708
      %v741 = vpack.c.b16 %v711, %v710
      %v742 = vpack.c.b16 %v713, %v712
      %v743 = vpack.c.b16 %v715, %v714
      %v744 = vpack.c.b16 %v717, %v716
      %v745 = vpack.c.b16 %v719, %v718
      %v746 = vpack.c.b16 %v721, %v720
      %v747 = vpack.c.b16 %v723, %v722
      %v748 = vpack.c.b16 %v725, %v724
      %v749 = vpack.c.b16 %v727, %v726
      %v750 = vpack.c.b16 %v729, %v728
      %v751 = vpack.c.b16 %v731, %v730
      %v752 = vpack.c.b16 %v733, %v732
      %v753 = vpack.c.b16 %v735, %v734
      %v754 = vpack.c.b16 %v737, %v736
      %v755 = vpack.c.b16 %v739, %v738
      %772 = vst [vmem:[%s223] sm:$0xff] %v740
      %773 = vst [vmem:[%s223 + $0x8] sm:$0xff] %v741
      %774 = vst [vmem:[%s223 + $0x10] sm:$0xff] %v742
      %775 = vst [vmem:[%s223 + $0x18] sm:$0xff] %v743
      %776 = vst [vmem:[%s223 + $0x20] sm:$0xff] %v744
      %777 = vst [vmem:[%s223 + $0x28] sm:$0xff] %v745
      %778 = vst [vmem:[%s223 + $0x30] sm:$0xff] %v746
      %779 = vst [vmem:[%s223 + $0x38] sm:$0xff] %v747
      %780 = vst [vmem:[%s223 + $0x40] sm:$0xff] %v748
      %781 = vst [vmem:[%s223 + $0x48] sm:$0xff] %v749
      %782 = vst [vmem:[%s223 + $0x50] sm:$0xff] %v750
      %783 = vst [vmem:[%s223 + $0x58] sm:$0xff] %v751
      %784 = vst [vmem:[%s223 + $0x60] sm:$0xff] %v752
      %785 = vst [vmem:[%s223 + $0x68] sm:$0xff] %v753
      %786 = vst [vmem:[%s223 + $0x70] sm:$0xff] %v754
      %787 = vst [vmem:[%s223 + $0x78] sm:$0xff] %v755
      %s788 = smul.u32 16, %s15
      %p789 = scmp.lt.s32.totalorder %s788, 31
      %s790 = scalar_select %p789, %s788, 31
      %s791 = smul.addr %s790, 2
      %s792 = smul.addr %s791, 4
      %s793 = scalar_lea.vmem %s4, %s792
      // Predicated region
      $region37: #{bgb_gcn_forward.5} parent=35 // pred_check
        %p794 = pneg %p127
      $region38: #{bgb_gcn_forward.5} parent=35 // pred_check_branch
        %796 = sbr.rel (%p794) target = $region40
      $region39: #{bgb_gcn_forward.5} parent=35 // pred_region
        %s797 = smul.u32 16, %s15
      $region40: #{bgb_gcn_forward.5} parent=35 // pred_fallthru
        _
    $region36: #{bgb_gcn_forward.5} parent=5 // pred_fallthru
      _
    %p798 = scmp.le.s32.totalorder 2, %s10
    // Predicated region
    $region41: #{bgb_gcn_forward.5} parent=5 // pred_check
      %p799 = pneg %p798
    $region42: #{bgb_gcn_forward.5} parent=5 // pred_check_branch
      %801 = sbr.rel (%p799) target = $region44
    $region43: #{bgb_gcn_forward.5} parent=5 // pred_region
      %s802 = ssub.s32 %s10, 2
      // Predicated region
      $region45: #{bgb_gcn_forward.5} parent=43 // pred_check
        %p803 = pneg %p133
      $region46: #{bgb_gcn_forward.5} parent=43 // pred_check_branch
        %805 = sbr.rel (%p803) target = $region48
      $region47: #{bgb_gcn_forward.5} parent=43 // pred_region
        %s806 = smul.u32 16, %s16
        %p807 = scmp.lt.s32.totalorder %s806, 31
        %s808 = scalar_select %p807, %s806, 31
        %s809 = smul.addr %s808, 2
        %s810 = smul.addr %s809, 4
        %s811 = scalar_lea.vmem %s4, %s810
      $region48: #{bgb_gcn_forward.5} parent=43 // pred_fallthru
        _
    $region44: #{bgb_gcn_forward.5} parent=5 // pred_fallthru
      _
  $region6: #{bgb_gcn_forward.5} parent=0 // loop_footer
    %s14 = sadd.s32 1, %s10
  $region7: #{bgb_gcn_forward.5} parent=0 // loop_footer_branch
    %9 = sbr.rel target = $region3
  $region8: #{bgb_gcn_forward.5} parent=0 // loop_exit
    _

// kernel: bgb_gcn_forward.6
$region0: #{bgb_gcn_forward.6}
  #allocation0 [shape = 'u32[]', space=smem, size = 0x4, offset = 0x4, fixed_abs, tag = 'smem constant byte address 0x4 - core index']
  #allocation1 [shape = 'u32[144,128]{1,0:T(1,128)}', space=vmem, size = 0x12000, scoped, tag = 'internal scratch']
  #allocation2 [shape = 'f32[128,128]{1,0:T(8,128)}', space=vmem, size = 0x10000, scoped, tag = 'scratch operand']
  %s0 = inlined_call_operand.vmem [shape: bf16[256,256], index: 0, kind: input, shape index: {}, may-alias: {0,1}]
  %s1 = inlined_call_operand.vmem [shape: bf16[256,256], index: 1, kind: input, shape index: {}, may-alias: {0,1}]
  %s2 = inlined_call_operand.vmem [shape: bf16[256,256], index: 2, kind: input, shape index: {}]
  %s3 = inlined_call_operand.vmem [shape: f32[8,128], index: 3, kind: input, shape index: {}]
  %s4 = inlined_call_operand.vmem [shape: bf16[256,128], index: 4, kind: output, shape index: {}]
  %s5 = sld [smem:[#allocation0]]
  $region180: #{bgb_gcn_forward.6} parent=0
    _
  %s7 = ssub.s32 1, %s5
  %s8 = scalar_select 0, %s7, %s5
  $region1: #{bgb_gcn_forward.6} parent=0
    #allocation3 [shape = 'u8[65536]{0}', space=vmem, size = 0x10000, scoped, tag = 'input window, operand 0']
    #allocation4 [shape = 'u8[65536]{0}', space=vmem, size = 0x10000, scoped, tag = 'input window, operand 1']
    #allocation5 [shape = 'u8[65536]{0}', space=vmem, size = 0x10000, scoped, tag = 'input window, operand 2']
    loop: start=0, step=1, limit=6
    $region2: #{bgb_gcn_forward.6} parent=1 // loop_pre_header
      _
    $region3: #{bgb_gcn_forward.6} parent=1 // loop_header
      %s10 = sphi 0, %s14
      %p11 = scmp.ge.s32.totalorder %s10, 6
      %s17 = sphi 0, %s29
      %s18 = sphi 0, %s25
      %s19 = sphi 0, %s17
      %s20 = sphi 0, %s18
      %s21 = sphi 0, %s19
      %s22 = sphi 0, %s20
      %s32 = sphi 0, %s34
      %s35 = sphi 0, %s32
      %s36 = sphi 0, %s35
      %s52 = sphi 0, %s36
      %s58 = sphi 0, %s60
      %s61 = sphi 0, %s58
      %s62 = sphi 0, %s61
      %s78 = sphi 0, %s62
      %s86 = sphi 0, %s88
      %s89 = sphi 0, %s86
      %s90 = sphi 0, %s89
      %s106 = sphi 0, %s90
      %s110 = sphi 0, %s110
      %s112 = sphi 0, %s110
      %s113 = sphi 0, %s112
      %s127 = sphi 0, %s113
      %s133 = sphi 0, %s135
      %s136 = sphi 0, %s133
      %s137 = sphi 0, %s136
      %s153 = sphi 0, %s137
    $region4: #{bgb_gcn_forward.6} parent=1 // loop_header_branch
      %13 = sbr.rel (%p11) target = $region8
    $region5: #{bgb_gcn_forward.6} parent=1 // loop_body
      %s15 = ssub.s32 %s10, 1
      %s16 = ssub.s32 %s10, 2
      %s23 = sadd.s32 1, %s18
      %p24 = scmp.ge.s32.totalorder %s23, 2
      %s25 = scalar_select %p24, 0, %s23
      %s26 = sadd.s32 1, %s17
      %s27 = scalar_select %p24, %s26, %s17
      %p28 = scmp.ge.s32.totalorder %s27, 2
      %s29 = scalar_select %p28, 0, %s27
      %s30 = ssub.s32 %s17, %s29
      %p31 = scmp.eq.s32.totalorder %s30, 0
      %s33 = sadd.s32 %s32, 1
      %s34 = scalar_select %p31, %s32, %s33
      %p37 = pneg %p31
      %p38 = scmp.eq.s32.totalorder %s10, 3
      %p39 = por %p37, %p38
      %p40 = scmp.ne.s32.totalorder %s32, %s35
      %p41 = scmp.eq.s32.totalorder %s10, 0
      %p42 = por %p40, %p41
      %p43 = scmp.ne.s32.totalorder %s32, %s35
      %p44 = scmp.eq.s32.totalorder %s15, 3
      %p45 = por %p43, %p44
      %p46 = scmp.ne.s32.totalorder %s35, %s36
      %p47 = scmp.eq.s32.totalorder %s15, 0
      %p48 = por %p46, %p47
      %p49 = scmp.ne.s32.totalorder %s35, %s36
      %p50 = scmp.eq.s32.totalorder %s16, 3
      %p51 = por %p49, %p50
      %p53 = scmp.ne.s32.totalorder %s36, %s52
      %p54 = scmp.eq.s32.totalorder %s16, 0
      %p55 = por %p53, %p54
      %s56 = ssub.s32 %s18, %s25
      %p57 = scmp.eq.s32.totalorder %s56, 0
      %s59 = sadd.s32 %s58, 1
      %s60 = scalar_select %p57, %s58, %s59
      %p63 = pneg %p57
      %p64 = scmp.eq.s32.totalorder %s10, 3
      %p65 = por %p63, %p64
      %p66 = scmp.ne.s32.totalorder %s58, %s61
      %p67 = scmp.eq.s32.totalorder %s10, 0
      %p68 = por %p66, %p67
      %p69 = scmp.ne.s32.totalorder %s58, %s61
      %p70 = scmp.eq.s32.totalorder %s15, 3
      %p71 = por %p69, %p70
      %p72 = scmp.ne.s32.totalorder %s61, %s62
      %p73 = scmp.eq.s32.totalorder %s15, 0
      %p74 = por %p72, %p73
      %p75 = scmp.ne.s32.totalorder %s61, %s62
      %p76 = scmp.eq.s32.totalorder %s16, 3
      %p77 = por %p75, %p76
      %p79 = scmp.ne.s32.totalorder %s62, %s78
      %p80 = scmp.eq.s32.totalorder %s16, 0
      %p81 = por %p79, %p80
      %s82 = ssub.s32 %s17, %s29
      %s83 = ssub.s32 %s18, %s25
      %s84 = sor.u32 %s82, %s83
      %p85 = scmp.eq.s32.totalorder %s84, 0
      %s87 = sadd.s32 %s86, 1
      %s88 = scalar_select %p85, %s86, %s87
      %p91 = pneg %p85
      %p92 = scmp.eq.s32.totalorder %s10, 3
      %p93 = por %p91, %p92
      %p94 = scmp.ne.s32.totalorder %s86, %s89
      %p95 = scmp.eq.s32.totalorder %s10, 0
      %p96 = por %p94, %p95
      %p97 = scmp.ne.s32.totalorder %s86, %s89
      %p98 = scmp.eq.s32.totalorder %s15, 3
      %p99 = por %p97, %p98
      %p100 = scmp.ne.s32.totalorder %s89, %s90
      %p101 = scmp.eq.s32.totalorder %s15, 0
      %p102 = por %p100, %p101
      %p103 = scmp.ne.s32.totalorder %s89, %s90
      %p104 = scmp.eq.s32.totalorder %s16, 3
      %p105 = por %p103, %p104
      %p107 = scmp.ne.s32.totalorder %s90, %s106
      %p108 = scmp.eq.s32.totalorder %s16, 0
      %p109 = por %p107, %p108
      %s111 = sadd.s32 %s110, 1
      %p114 = scmp.eq.s32.totalorder %s10, 3
      %p115 = scmp.ne.s32.totalorder %s110, %s112
      %p116 = scmp.eq.s32.totalorder %s10, 0
      %p117 = por %p115, %p116
      %p118 = scmp.ne.s32.totalorder %s110, %s112
      %p119 = scmp.eq.s32.totalorder %s15, 3
      %p120 = por %p118, %p119
      %p121 = scmp.ne.s32.totalorder %s112, %s113
      %p122 = scmp.eq.s32.totalorder %s15, 0
      %p123 = por %p121, %p122
      %p124 = scmp.ne.s32.totalorder %s112, %s113
      %p125 = scmp.eq.s32.totalorder %s16, 3
      %p126 = por %p124, %p125
      %p128 = scmp.ne.s32.totalorder %s113, %s127
      %p129 = scmp.eq.s32.totalorder %s16, 0
      %p130 = por %p128, %p129
      %s131 = ssub.s32 %s17, %s29
      %p132 = scmp.eq.s32.totalorder %s131, 0
      %s134 = sadd.s32 %s133, 1
      %s135 = scalar_select %p132, %s133, %s134
      %p138 = pneg %p132
      %p139 = scmp.eq.s32.totalorder %s10, 3
      %p140 = por %p138, %p139
      %p141 = scmp.ne.s32.totalorder %s133, %s136
      %p142 = scmp.eq.s32.totalorder %s10, 0
      %p143 = por %p141, %p142
      %p144 = scmp.ne.s32.totalorder %s133, %s136
      %p145 = scmp.eq.s32.totalorder %s15, 3
      %p146 = por %p144, %p145
      %p147 = scmp.ne.s32.totalorder %s136, %s137
      %p148 = scmp.eq.s32.totalorder %s15, 0
      %p149 = por %p147, %p148
      %p150 = scmp.ne.s32.totalorder %s136, %s137
      %p151 = scmp.eq.s32.totalorder %s16, 3
      %p152 = por %p150, %p151
      %p154 = scmp.ne.s32.totalorder %s137, %s153
      %p155 = scmp.eq.s32.totalorder %s16, 0
      %p156 = por %p154, %p155
      %p157 = scmp.le.s32.totalorder 1, %s10
      %p158 = scmp.lt.s32.totalorder %s10, 5
      %p159 = pnand %p157, %p158
      %p160 = pneg %p159
      // Predicated region
      $region9: #{bgb_gcn_forward.6} parent=5 // pred_check
        _
      $region10: #{bgb_gcn_forward.6} parent=5 // pred_check_branch
        %162 = sbr.rel (%p159) target = $region12
      $region11: #{bgb_gcn_forward.6} parent=5 // pred_region
        %s163 = ssub.s32 %s10, 1
        // Predicated region
        $region13: #{bgb_gcn_forward.6} parent=11 // pred_check
          %p164 = pneg %p123
        $region14: #{bgb_gcn_forward.6} parent=11 // pred_check_branch
          %166 = sbr.rel (%p164) target = $region16
        $region15: #{bgb_gcn_forward.6} parent=11 // pred_region
          _
        $region16: #{bgb_gcn_forward.6} parent=11 // pred_fallthru
          _
      $region12: #{bgb_gcn_forward.6} parent=5 // pred_fallthru
        _
      %p167 = scmp.lt.s32.totalorder %s10, 4
      // Predicated region
      $region17: #{bgb_gcn_forward.6} parent=5 // pred_check
        %p168 = pneg %p167
      $region18: #{bgb_gcn_forward.6} parent=5 // pred_check_branch
        %170 = sbr.rel (%p168) target = $region20
      $region19: #{bgb_gcn_forward.6} parent=5 // pred_region
        // Predicated region
        $region21: #{bgb_gcn_forward.6} parent=19 // pred_check
          %p171 = pneg %p42
        $region22: #{bgb_gcn_forward.6} parent=19 // pred_check_branch
          %173 = sbr.rel (%p171) target = $region24
        $region23: #{bgb_gcn_forward.6} parent=19 // pred_region
          %s174 = sand.u32 %s32, 1
          %s175 = sand.u32 %s32, 1
          %s176 = smul.addr %s175, 64
          %s177 = scalar_lea.vmem [#allocation3], %s176
          %s178 = smul.u32 16, %s17
          %s179 = smul.addr %s178, 2
          %s180 = smul.addr %s179, 4
          %s181 = scalar_lea.vmem %s0, %s180
          // Predicated region
          $region25: #{bgb_gcn_forward.6} parent=23 // pred_check
            _
          $region26: #{bgb_gcn_forward.6} parent=23 // pred_check_branch
            %183 = sbr.rel (0) target = $region28
          $region27: #{bgb_gcn_forward.6} parent=23 // pred_region
            // Predicated region
            $region29: #{bgb_gcn_forward.6} parent=27 // pred_check
              _
            $region30: #{bgb_gcn_forward.6} parent=27 // pred_check_branch
              %185 = sbr.rel target = $region32
            $region31: #{bgb_gcn_forward.6} parent=27 // pred_region
              // Predicated region
              $region44: #{bgb_gcn_forward.6} parent=31 // pred_check
                _
              $region45: #{bgb_gcn_forward.6} parent=31 // pred_check_branch
                %230 = sbr.rel (0) target = $region47
              $region46: #{bgb_gcn_forward.6} parent=31 // pred_region
                loop: start=0, step=1, limit=1
                $region48: #{bgb_gcn_forward.6} parent=46 // loop_pre_header
                  _
                $region49: #{bgb_gcn_forward.6} parent=46 // loop_header
                  %s232 = sphi 0, %s236
                  %p233 = scmp.ge.s32.totalorder %s232, 1
                  %s237 = sphi %s181, %s181
                  %s238 = sphi %s177, %s177
                $region50: #{bgb_gcn_forward.6} parent=46 // loop_header_branch
                  %235 = sbr.rel (%p233) target = $region54
                $region51: #{bgb_gcn_forward.6} parent=46 // loop_body
                  _
                $region52: #{bgb_gcn_forward.6} parent=46 // loop_footer
                  %s236 = sadd.s32 1, %s232
                $region53: #{bgb_gcn_forward.6} parent=46 // loop_footer_branch
                  %231 = sbr.rel target = $region49
                $region54: #{bgb_gcn_forward.6} parent=46 // loop_exit
                  _
                loop: start=0, step=1, limit=1
                $region55: #{bgb_gcn_forward.6} parent=46 // loop_pre_header
                  _
                $region56: #{bgb_gcn_forward.6} parent=46 // loop_header
                  %s241 = sphi 0, %s245
                  %p242 = scmp.ge.s32.totalorder %s241, 1
                  %s246 = sphi %s181, %s181
                  %s247 = sphi %s177, %s177
                $region57: #{bgb_gcn_forward.6} parent=46 // loop_header_branch
                  %244 = sbr.rel (%p242) target = $region61
                $region58: #{bgb_gcn_forward.6} parent=46 // loop_body
                  %v248 = vld [vmem:[%s246] sm:$0xf]
                  %249 = vst [vmem:[%s247] sm:$0xf] %v248
                  %v250 = vld [vmem:[%s246 + $0x8] sm:$0xf]
                  %251 = vst [vmem:[%s247 + $0x4] sm:$0xf] %v250
                  %v252 = vld [vmem:[%s246 + $0x10] sm:$0xf]
                  %253 = vst [vmem:[%s247 + $0x8] sm:$0xf] %v252
                  %v254 = vld [vmem:[%s246 + $0x18] sm:$0xf]
                  %255 = vst [vmem:[%s247 + $0xc] sm:$0xf] %v254
                  %v256 = vld [vmem:[%s246 + $0x20] sm:$0xf]
                  %257 = vst [vmem:[%s247 + $0x10] sm:$0xf] %v256
                  %v258 = vld [vmem:[%s246 + $0x28] sm:$0xf]
                  %259 = vst [vmem:[%s247 + $0x14] sm:$0xf] %v258
                  %v260 = vld [vmem:[%s246 + $0x30] sm:$0xf]
                  %261 = vst [vmem:[%s247 + $0x18] sm:$0xf] %v260
                  %v262 = vld [vmem:[%s246 + $0x38] sm:$0xf]
                  %263 = vst [vmem:[%s247 + $0x1c] sm:$0xf] %v262
                  %v264 = vld [vmem:[%s246 + $0x40] sm:$0xf]
                  %265 = vst [vmem:[%s247 + $0x20] sm:$0xf] %v264
                  %v266 = vld [vmem:[%s246 + $0x48] sm:$0xf]
                  %267 = vst [vmem:[%s247 + $0x24] sm:$0xf] %v266
                  %v268 = vld [vmem:[%s246 + $0x50] sm:$0xf]
                  %269 = vst [vmem:[%s247 + $0x28] sm:$0xf] %v268
                  %v270 = vld [vmem:[%s246 + $0x58] sm:$0xf]
                  %271 = vst [vmem:[%s247 + $0x2c] sm:$0xf] %v270
                  %v272 = vld [vmem:[%s246 + $0x60] sm:$0xf]
                  %273 = vst [vmem:[%s247 + $0x30] sm:$0xf] %v272
                  %v274 = vld [vmem:[%s246 + $0x68] sm:$0xf]
                  %275 = vst [vmem:[%s247 + $0x34] sm:$0xf] %v274
                  %v276 = vld [vmem:[%s246 + $0x70] sm:$0xf]
                  %277 = vst [vmem:[%s247 + $0x38] sm:$0xf] %v276
                  %v278 = vld [vmem:[%s246 + $0x78] sm:$0xf]
                  %279 = vst [vmem:[%s247 + $0x3c] sm:$0xf] %v278
                $region59: #{bgb_gcn_forward.6} parent=46 // loop_footer
                  %s245 = sadd.s32 1, %s241
                $region60: #{bgb_gcn_forward.6} parent=46 // loop_footer_branch
                  %240 = sbr.rel target = $region56
                $region61: #{bgb_gcn_forward.6} parent=46 // loop_exit
                  _
              $region47: #{bgb_gcn_forward.6} parent=31 // pred_fallthru
                _
            $region32: #{bgb_gcn_forward.6} parent=27 // pred_fallthru
              _
            // Predicated region
            $region33: #{bgb_gcn_forward.6} parent=27 // pred_check
              _
            $region34: #{bgb_gcn_forward.6} parent=27 // pred_check_branch
              %187 = sbr.rel (0) target = $region36
            $region35: #{bgb_gcn_forward.6} parent=27 // pred_region
              loop: start=0, step=1, limit=1
              $region37: #{bgb_gcn_forward.6} parent=35 // loop_pre_header
                _
              $region38: #{bgb_gcn_forward.6} parent=35 // loop_header
                %s190 = sphi 0, %s194
                %p191 = scmp.ge.s32.totalorder %s190, 1
                %s195 = sphi %s181, %s181
                %s196 = sphi %s177, %s177
              $region39: #{bgb_gcn_forward.6} parent=35 // loop_header_branch
                %193 = sbr.rel (%p191) target = $region43
              $region40: #{bgb_gcn_forward.6} parent=35 // loop_body
                %v197 = vld [vmem:[%s195] sm:$0xf]
                %198 = vst [vmem:[%s196] sm:$0xf] %v197
                %v199 = vld [vmem:[%s195 + $0x8] sm:$0xf]
                %200 = vst [vmem:[%s196 + $0x4] sm:$0xf] %v199
                %v201 = vld [vmem:[%s195 + $0x10] sm:$0xf]
                %202 = vst [vmem:[%s196 + $0x8] sm:$0xf] %v201
                %v203 = vld [vmem:[%s195 + $0x18] sm:$0xf]
                %204 = vst [vmem:[%s196 + $0xc] sm:$0xf] %v203
                %v205 = vld [vmem:[%s195 + $0x20] sm:$0xf]
                %206 = vst [vmem:[%s196 + $0x10] sm:$0xf] %v205
                %v207 = vld [vmem:[%s195 + $0x28] sm:$0xf]
                %208 = vst [vmem:[%s196 + $0x14] sm:$0xf] %v207
                %v209 = vld [vmem:[%s195 + $0x30] sm:$0xf]
                %210 = vst [vmem:[%s196 + $0x18] sm:$0xf] %v209
                %v211 = vld [vmem:[%s195 + $0x38] sm:$0xf]
                %212 = vst [vmem:[%s196 + $0x1c] sm:$0xf] %v211
                %v213 = vld [vmem:[%s195 + $0x40] sm:$0xf]
                %214 = vst [vmem:[%s196 + $0x20] sm:$0xf] %v213
                %v215 = vld [vmem:[%s195 + $0x48] sm:$0xf]
                %216 = vst [vmem:[%s196 + $0x24] sm:$0xf] %v215
                %v217 = vld [vmem:[%s195 + $0x50] sm:$0xf]
                %218 = vst [vmem:[%s196 + $0x28] sm:$0xf] %v217
                %v219 = vld [vmem:[%s195 + $0x58] sm:$0xf]
                %220 = vst [vmem:[%s196 + $0x2c] sm:$0xf] %v219
                %v221 = vld [vmem:[%s195 + $0x60] sm:$0xf]
                %222 = vst [vmem:[%s196 + $0x30] sm:$0xf] %v221
                %v223 = vld [vmem:[%s195 + $0x68] sm:$0xf]
                %224 = vst [vmem:[%s196 + $0x34] sm:$0xf] %v223
                %v225 = vld [vmem:[%s195 + $0x70] sm:$0xf]
                %226 = vst [vmem:[%s196 + $0x38] sm:$0xf] %v225
                %v227 = vld [vmem:[%s195 + $0x78] sm:$0xf]
                %228 = vst [vmem:[%s196 + $0x3c] sm:$0xf] %v227
              $region41: #{bgb_gcn_forward.6} parent=35 // loop_footer
                %s194 = sadd.s32 1, %s190
              $region42: #{bgb_gcn_forward.6} parent=35 // loop_footer_branch
                %189 = sbr.rel target = $region38
              $region43: #{bgb_gcn_forward.6} parent=35 // loop_exit
                _
            $region36: #{bgb_gcn_forward.6} parent=27 // pred_fallthru
              _
          $region28: #{bgb_gcn_forward.6} parent=23 // pred_fallthru
            _
          %280 = vnop
        $region24: #{bgb_gcn_forward.6} parent=19 // pred_fallthru
          _
        // Predicated region
        $region62: #{bgb_gcn_forward.6} parent=19 // pred_check
          %p281 = pneg %p68
        $region63: #{bgb_gcn_forward.6} parent=19 // pred_check_branch
          %283 = sbr.rel (%p281) target = $region65
        $region64: #{bgb_gcn_forward.6} parent=19 // pred_region
          %s284 = sand.u32 %s58, 1
          %s285 = sand.u32 %s58, 1
          %s286 = smul.addr %s285, 64
          %s287 = scalar_lea.vmem [#allocation4], %s286
          %s288 = smul.u32 16, %s18
          %s289 = smul.addr %s288, 2
          %s290 = sadd.s32 1, %s289
          %s291 = smul.addr %s290, 4
          %s292 = scalar_lea.vmem %s1, %s291
          // Predicated region
          $region66: #{bgb_gcn_forward.6} parent=64 // pred_check
            _
          $region67: #{bgb_gcn_forward.6} parent=64 // pred_check_branch
            %294 = sbr.rel (0) target = $region69
          $region68: #{bgb_gcn_forward.6} parent=64 // pred_region
            // Predicated region
            $region70: #{bgb_gcn_forward.6} parent=68 // pred_check
              _
            $region71: #{bgb_gcn_forward.6} parent=68 // pred_check_branch
              %296 = sbr.rel target = $region73
            $region72: #{bgb_gcn_forward.6} parent=68 // pred_region
              // Predicated region
              $region85: #{bgb_gcn_forward.6} parent=72 // pred_check
                _
              $region86: #{bgb_gcn_forward.6} parent=72 // pred_check_branch
                %341 = sbr.rel (0) target = $region88
              $region87: #{bgb_gcn_forward.6} parent=72 // pred_region
                loop: start=0, step=1, limit=1
                $region89: #{bgb_gcn_forward.6} parent=87 // loop_pre_header
                  _
                $region90: #{bgb_gcn_forward.6} parent=87 // loop_header
                  %s343 = sphi 0, %s347
                  %p344 = scmp.ge.s32.totalorder %s343, 1
                  %s348 = sphi %s292, %s292
                  %s349 = sphi %s287, %s287
                $region91: #{bgb_gcn_forward.6} parent=87 // loop_header_branch
                  %346 = sbr.rel (%p344) target = $region95
                $region92: #{bgb_gcn_forward.6} parent=87 // loop_body
                  _
                $region93: #{bgb_gcn_forward.6} parent=87 // loop_footer
                  %s347 = sadd.s32 1, %s343
                $region94: #{bgb_gcn_forward.6} parent=87 // loop_footer_branch
                  %342 = sbr.rel target = $region90
                $region95: #{bgb_gcn_forward.6} parent=87 // loop_exit
                  _
                loop: start=0, step=1, limit=1
                $region96: #{bgb_gcn_forward.6} parent=87 // loop_pre_header
                  _
                $region97: #{bgb_gcn_forward.6} parent=87 // loop_header
                  %s352 = sphi 0, %s356
                  %p353 = scmp.ge.s32.totalorder %s352, 1
                  %s357 = sphi %s292, %s292
                  %s358 = sphi %s287, %s287
                $region98: #{bgb_gcn_forward.6} parent=87 // loop_header_branch
                  %355 = sbr.rel (%p353) target = $region102
                $region99: #{bgb_gcn_forward.6} parent=87 // loop_body
                  %v359 = vld [vmem:[%s357] sm:$0xf]
                  %360 = vst [vmem:[%s358] sm:$0xf] %v359
                  %v361 = vld [vmem:[%s357 + $0x8] sm:$0xf]
                  %362 = vst [vmem:[%s358 + $0x4] sm:$0xf] %v361
                  %v363 = vld [vmem:[%s357 + $0x10] sm:$0xf]
                  %364 = vst [vmem:[%s358 + $0x8] sm:$0xf] %v363
                  %v365 = vld [vmem:[%s357 + $0x18] sm:$0xf]
                  %366 = vst [vmem:[%s358 + $0xc] sm:$0xf] %v365
                  %v367 = vld [vmem:[%s357 + $0x20] sm:$0xf]
                  %368 = vst [vmem:[%s358 + $0x10] sm:$0xf] %v367
                  %v369 = vld [vmem:[%s357 + $0x28] sm:$0xf]
                  %370 = vst [vmem:[%s358 + $0x14] sm:$0xf] %v369
                  %v371 = vld [vmem:[%s357 + $0x30] sm:$0xf]
                  %372 = vst [vmem:[%s358 + $0x18] sm:$0xf] %v371
                  %v373 = vld [vmem:[%s357 + $0x38] sm:$0xf]
                  %374 = vst [vmem:[%s358 + $0x1c] sm:$0xf] %v373
                  %v375 = vld [vmem:[%s357 + $0x40] sm:$0xf]
                  %376 = vst [vmem:[%s358 + $0x20] sm:$0xf] %v375
                  %v377 = vld [vmem:[%s357 + $0x48] sm:$0xf]
                  %378 = vst [vmem:[%s358 + $0x24] sm:$0xf] %v377
                  %v379 = vld [vmem:[%s357 + $0x50] sm:$0xf]
                  %380 = vst [vmem:[%s358 + $0x28] sm:$0xf] %v379
                  %v381 = vld [vmem:[%s357 + $0x58] sm:$0xf]
                  %382 = vst [vmem:[%s358 + $0x2c] sm:$0xf] %v381
                  %v383 = vld [vmem:[%s357 + $0x60] sm:$0xf]
                  %384 = vst [vmem:[%s358 + $0x30] sm:$0xf] %v383
                  %v385 = vld [vmem:[%s357 + $0x68] sm:$0xf]
                  %386 = vst [vmem:[%s358 + $0x34] sm:$0xf] %v385
                  %v387 = vld [vmem:[%s357 + $0x70] sm:$0xf]
                  %388 = vst [vmem:[%s358 + $0x38] sm:$0xf] %v387
                  %v389 = vld [vmem:[%s357 + $0x78] sm:$0xf]
                  %390 = vst [vmem:[%s358 + $0x3c] sm:$0xf] %v389
                $region100: #{bgb_gcn_forward.6} parent=87 // loop_footer
                  %s356 = sadd.s32 1, %s352
                $region101: #{bgb_gcn_forward.6} parent=87 // loop_footer_branch
                  %351 = sbr.rel target = $region97
                $region102: #{bgb_gcn_forward.6} parent=87 // loop_exit
                  _
              $region88: #{bgb_gcn_forward.6} parent=72 // pred_fallthru
                _
            $region73: #{bgb_gcn_forward.6} parent=68 // pred_fallthru
              _
            // Predicated region
            $region74: #{bgb_gcn_forward.6} parent=68 // pred_check
              _
            $region75: #{bgb_gcn_forward.6} parent=68 // pred_check_branch
              %298 = sbr.rel (0) target = $region77
            $region76: #{bgb_gcn_forward.6} parent=68 // pred_region
              loop: start=0, step=1, limit=1
              $region78: #{bgb_gcn_forward.6} parent=76 // loop_pre_header
                _
              $region79: #{bgb_gcn_forward.6} parent=76 // loop_header
                %s301 = sphi 0, %s305
                %p302 = scmp.ge.s32.totalorder %s301, 1
                %s306 = sphi %s292, %s292
                %s307 = sphi %s287, %s287
              $region80: #{bgb_gcn_forward.6} parent=76 // loop_header_branch
                %304 = sbr.rel (%p302) target = $region84
              $region81: #{bgb_gcn_forward.6} parent=76 // loop_body
                %v308 = vld [vmem:[%s306] sm:$0xf]
                %309 = vst [vmem:[%s307] sm:$0xf] %v308
                %v310 = vld [vmem:[%s306 + $0x8] sm:$0xf]
                %311 = vst [vmem:[%s307 + $0x4] sm:$0xf] %v310
                %v312 = vld [vmem:[%s306 + $0x10] sm:$0xf]
                %313 = vst [vmem:[%s307 + $0x8] sm:$0xf] %v312
                %v314 = vld [vmem:[%s306 + $0x18] sm:$0xf]
                %315 = vst [vmem:[%s307 + $0xc] sm:$0xf] %v314
                %v316 = vld [vmem:[%s306 + $0x20] sm:$0xf]
                %317 = vst [vmem:[%s307 + $0x10] sm:$0xf] %v316
                %v318 = vld [vmem:[%s306 + $0x28] sm:$0xf]
                %319 = vst [vmem:[%s307 + $0x14] sm:$0xf] %v318
                %v320 = vld [vmem:[%s306 + $0x30] sm:$0xf]
                %321 = vst [vmem:[%s307 + $0x18] sm:$0xf] %v320
                %v322 = vld [vmem:[%s306 + $0x38] sm:$0xf]
                %323 = vst [vmem:[%s307 + $0x1c] sm:$0xf] %v322
                %v324 = vld [vmem:[%s306 + $0x40] sm:$0xf]
                %325 = vst [vmem:[%s307 + $0x20] sm:$0xf] %v324
                %v326 = vld [vmem:[%s306 + $0x48] sm:$0xf]
                %327 = vst [vmem:[%s307 + $0x24] sm:$0xf] %v326
                %v328 = vld [vmem:[%s306 + $0x50] sm:$0xf]
                %329 = vst [vmem:[%s307 + $0x28] sm:$0xf] %v328
                %v330 = vld [vmem:[%s306 + $0x58] sm:$0xf]
                %331 = vst [vmem:[%s307 + $0x2c] sm:$0xf] %v330
                %v332 = vld [vmem:[%s306 + $0x60] sm:$0xf]
                %333 = vst [vmem:[%s307 + $0x30] sm:$0xf] %v332
                %v334 = vld [vmem:[%s306 + $0x68] sm:$0xf]
                %335 = vst [vmem:[%s307 + $0x34] sm:$0xf] %v334
                %v336 = vld [vmem:[%s306 + $0x70] sm:$0xf]
                %337 = vst [vmem:[%s307 + $0x38] sm:$0xf] %v336
                %v338 = vld [vmem:[%s306 + $0x78] sm:$0xf]
                %339 = vst [vmem:[%s307 + $0x3c] sm:$0xf] %v338
              $region82: #{bgb_gcn_forward.6} parent=76 // loop_footer
                %s305 = sadd.s32 1, %s301
              $region83: #{bgb_gcn_forward.6} parent=76 // loop_footer_branch
                %300 = sbr.rel target = $region79
              $region84: #{bgb_gcn_forward.6} parent=76 // loop_exit
                _
            $region77: #{bgb_gcn_forward.6} parent=68 // pred_fallthru
              _
          $region69: #{bgb_gcn_forward.6} parent=64 // pred_fallthru
            _
          %391 = vnop
        $region65: #{bgb_gcn_forward.6} parent=19 // pred_fallthru
          _
        // Predicated region
        $region103: #{bgb_gcn_forward.6} parent=19 // pred_check
          %p392 = pneg %p96
        $region104: #{bgb_gcn_forward.6} parent=19 // pred_check_branch
          %394 = sbr.rel (%p392) target = $region106
        $region105: #{bgb_gcn_forward.6} parent=19 // pred_region
          %s395 = sand.u32 %s86, 1
          %s396 = sand.u32 %s86, 1
          %s397 = smul.addr %s396, 64
          %s398 = scalar_lea.vmem [#allocation5], %s397
          %s399 = smul.u32 16, %s17
          %s400 = smul.addr %s399, 2
          %s401 = sadd.s32 %s18, %s400
          %s402 = smul.addr %s401, 4
          %s403 = scalar_lea.vmem %s2, %s402
          // Predicated region
          $region107: #{bgb_gcn_forward.6} parent=105 // pred_check
            _
          $region108: #{bgb_gcn_forward.6} parent=105 // pred_check_branch
            %405 = sbr.rel (0) target = $region110
          $region109: #{bgb_gcn_forward.6} parent=105 // pred_region
            // Predicated region
            $region111: #{bgb_gcn_forward.6} parent=109 // pred_check
              _
            $region112: #{bgb_gcn_forward.6} parent=109 // pred_check_branch
              %407 = sbr.rel target = $region114
            $region113: #{bgb_gcn_forward.6} parent=109 // pred_region
              // Predicated region
              $region126: #{bgb_gcn_forward.6} parent=113 // pred_check
                _
              $region127: #{bgb_gcn_forward.6} parent=113 // pred_check_branch
                %452 = sbr.rel (0) target = $region129
              $region128: #{bgb_gcn_forward.6} parent=113 // pred_region
                loop: start=0, step=1, limit=1
                $region130: #{bgb_gcn_forward.6} parent=128 // loop_pre_header
                  _
                $region131: #{bgb_gcn_forward.6} parent=128 // loop_header
                  %s454 = sphi 0, %s458
                  %p455 = scmp.ge.s32.totalorder %s454, 1
                  %s459 = sphi %s403, %s403
                  %s460 = sphi %s398, %s398
                $region132: #{bgb_gcn_forward.6} parent=128 // loop_header_branch
                  %457 = sbr.rel (%p455) target = $region136
                $region133: #{bgb_gcn_forward.6} parent=128 // loop_body
                  _
                $region134: #{bgb_gcn_forward.6} parent=128 // loop_footer
                  %s458 = sadd.s32 1, %s454
                $region135: #{bgb_gcn_forward.6} parent=128 // loop_footer_branch
                  %453 = sbr.rel target = $region131
                $region136: #{bgb_gcn_forward.6} parent=128 // loop_exit
                  _
                loop: start=0, step=1, limit=1
                $region137: #{bgb_gcn_forward.6} parent=128 // loop_pre_header
                  _
                $region138: #{bgb_gcn_forward.6} parent=128 // loop_header
                  %s463 = sphi 0, %s467
                  %p464 = scmp.ge.s32.totalorder %s463, 1
                  %s468 = sphi %s403, %s403
                  %s469 = sphi %s398, %s398
                $region139: #{bgb_gcn_forward.6} parent=128 // loop_header_branch
                  %466 = sbr.rel (%p464) target = $region143
                $region140: #{bgb_gcn_forward.6} parent=128 // loop_body
                  %v470 = vld [vmem:[%s468] sm:$0xf]
                  %471 = vst [vmem:[%s469] sm:$0xf] %v470
                  %v472 = vld [vmem:[%s468 + $0x8] sm:$0xf]
                  %473 = vst [vmem:[%s469 + $0x4] sm:$0xf] %v472
                  %v474 = vld [vmem:[%s468 + $0x10] sm:$0xf]
                  %475 = vst [vmem:[%s469 + $0x8] sm:$0xf] %v474
                  %v476 = vld [vmem:[%s468 + $0x18] sm:$0xf]
                  %477 = vst [vmem:[%s469 + $0xc] sm:$0xf] %v476
                  %v478 = vld [vmem:[%s468 + $0x20] sm:$0xf]
                  %479 = vst [vmem:[%s469 + $0x10] sm:$0xf] %v478
                  %v480 = vld [vmem:[%s468 + $0x28] sm:$0xf]
                  %481 = vst [vmem:[%s469 + $0x14] sm:$0xf] %v480
                  %v482 = vld [vmem:[%s468 + $0x30] sm:$0xf]
                  %483 = vst [vmem:[%s469 + $0x18] sm:$0xf] %v482
                  %v484 = vld [vmem:[%s468 + $0x38] sm:$0xf]
                  %485 = vst [vmem:[%s469 + $0x1c] sm:$0xf] %v484
                  %v486 = vld [vmem:[%s468 + $0x40] sm:$0xf]
                  %487 = vst [vmem:[%s469 + $0x20] sm:$0xf] %v486
                  %v488 = vld [vmem:[%s468 + $0x48] sm:$0xf]
                  %489 = vst [vmem:[%s469 + $0x24] sm:$0xf] %v488
                  %v490 = vld [vmem:[%s468 + $0x50] sm:$0xf]
                  %491 = vst [vmem:[%s469 + $0x28] sm:$0xf] %v490
                  %v492 = vld [vmem:[%s468 + $0x58] sm:$0xf]
                  %493 = vst [vmem:[%s469 + $0x2c] sm:$0xf] %v492
                  %v494 = vld [vmem:[%s468 + $0x60] sm:$0xf]
                  %495 = vst [vmem:[%s469 + $0x30] sm:$0xf] %v494
                  %v496 = vld [vmem:[%s468 + $0x68] sm:$0xf]
                  %497 = vst [vmem:[%s469 + $0x34] sm:$0xf] %v496
                  %v498 = vld [vmem:[%s468 + $0x70] sm:$0xf]
                  %499 = vst [vmem:[%s469 + $0x38] sm:$0xf] %v498
                  %v500 = vld [vmem:[%s468 + $0x78] sm:$0xf]
                  %501 = vst [vmem:[%s469 + $0x3c] sm:$0xf] %v500
                $region141: #{bgb_gcn_forward.6} parent=128 // loop_footer
                  %s467 = sadd.s32 1, %s463
                $region142: #{bgb_gcn_forward.6} parent=128 // loop_footer_branch
                  %462 = sbr.rel target = $region138
                $region143: #{bgb_gcn_forward.6} parent=128 // loop_exit
                  _
              $region129: #{bgb_gcn_forward.6} parent=113 // pred_fallthru
                _
            $region114: #{bgb_gcn_forward.6} parent=109 // pred_fallthru
              _
            // Predicated region
            $region115: #{bgb_gcn_forward.6} parent=109 // pred_check
              _
            $region116: #{bgb_gcn_forward.6} parent=109 // pred_check_branch
              %409 = sbr.rel (0) target = $region118
            $region117: #{bgb_gcn_forward.6} parent=109 // pred_region
              loop: start=0, step=1, limit=1
              $region119: #{bgb_gcn_forward.6} parent=117 // loop_pre_header
                _
              $region120: #{bgb_gcn_forward.6} parent=117 // loop_header
                %s412 = sphi 0, %s416
                %p413 = scmp.ge.s32.totalorder %s412, 1
                %s417 = sphi %s403, %s403
                %s418 = sphi %s398, %s398
              $region121: #{bgb_gcn_forward.6} parent=117 // loop_header_branch
                %415 = sbr.rel (%p413) target = $region125
              $region122: #{bgb_gcn_forward.6} parent=117 // loop_body
                %v419 = vld [vmem:[%s417] sm:$0xf]
                %420 = vst [vmem:[%s418] sm:$0xf] %v419
                %v421 = vld [vmem:[%s417 + $0x8] sm:$0xf]
                %422 = vst [vmem:[%s418 + $0x4] sm:$0xf] %v421
                %v423 = vld [vmem:[%s417 + $0x10] sm:$0xf]
                %424 = vst [vmem:[%s418 + $0x8] sm:$0xf] %v423
                %v425 = vld [vmem:[%s417 + $0x18] sm:$0xf]
                %426 = vst [vmem:[%s418 + $0xc] sm:$0xf] %v425
                %v427 = vld [vmem:[%s417 + $0x20] sm:$0xf]
                %428 = vst [vmem:[%s418 + $0x10] sm:$0xf] %v427
                %v429 = vld [vmem:[%s417 + $0x28] sm:$0xf]
                %430 = vst [vmem:[%s418 + $0x14] sm:$0xf] %v429
                %v431 = vld [vmem:[%s417 + $0x30] sm:$0xf]
                %432 = vst [vmem:[%s418 + $0x18] sm:$0xf] %v431
                %v433 = vld [vmem:[%s417 + $0x38] sm:$0xf]
                %434 = vst [vmem:[%s418 + $0x1c] sm:$0xf] %v433
                %v435 = vld [vmem:[%s417 + $0x40] sm:$0xf]
                %436 = vst [vmem:[%s418 + $0x20] sm:$0xf] %v435
                %v437 = vld [vmem:[%s417 + $0x48] sm:$0xf]
                %438 = vst [vmem:[%s418 + $0x24] sm:$0xf] %v437
                %v439 = vld [vmem:[%s417 + $0x50] sm:$0xf]
                %440 = vst [vmem:[%s418 + $0x28] sm:$0xf] %v439
                %v441 = vld [vmem:[%s417 + $0x58] sm:$0xf]
                %442 = vst [vmem:[%s418 + $0x2c] sm:$0xf] %v441
                %v443 = vld [vmem:[%s417 + $0x60] sm:$0xf]
                %444 = vst [vmem:[%s418 + $0x30] sm:$0xf] %v443
                %v445 = vld [vmem:[%s417 + $0x68] sm:$0xf]
                %446 = vst [vmem:[%s418 + $0x34] sm:$0xf] %v445
                %v447 = vld [vmem:[%s417 + $0x70] sm:$0xf]
                %448 = vst [vmem:[%s418 + $0x38] sm:$0xf] %v447
                %v449 = vld [vmem:[%s417 + $0x78] sm:$0xf]
                %450 = vst [vmem:[%s418 + $0x3c] sm:$0xf] %v449
              $region123: #{bgb_gcn_forward.6} parent=117 // loop_footer
                %s416 = sadd.s32 1, %s412
              $region124: #{bgb_gcn_forward.6} parent=117 // loop_footer_branch
                %411 = sbr.rel target = $region120
              $region125: #{bgb_gcn_forward.6} parent=117 // loop_exit
                _
            $region118: #{bgb_gcn_forward.6} parent=109 // pred_fallthru
              _
          $region110: #{bgb_gcn_forward.6} parent=105 // pred_fallthru
            _
          %502 = vnop
        $region106: #{bgb_gcn_forward.6} parent=19 // pred_fallthru
          _
      $region20: #{bgb_gcn_forward.6} parent=5 // pred_fallthru
        _
      %p503 = scmp.le.s32.totalorder 1, %s10
      %p504 = scmp.lt.s32.totalorder %s10, 5
      %p505 = pnand %p503, %p504
      %p506 = pneg %p505
      // Predicated region
      $region144: #{bgb_gcn_forward.6} parent=5 // pred_check
        _
      $region145: #{bgb_gcn_forward.6} parent=5 // pred_check_branch
        %508 = sbr.rel (%p505) target = $region147
      $region146: #{bgb_gcn_forward.6} parent=5 // pred_region
        %s509 = ssub.s32 %s10, 1
        %s510 = sand.u32 %s35, 1
        %s511 = sand.u32 %s35, 1
        %s512 = smul.addr %s511, 64
        %s513 = scalar_lea.vmem [#allocation3], %s512
        // Predicated region
        $region148: #{bgb_gcn_forward.6} parent=146 // pred_check
          %p514 = pneg %p48
        $region149: #{bgb_gcn_forward.6} parent=146 // pred_check_branch
          %516 = sbr.rel (%p514) target = $region151
        $region150: #{bgb_gcn_forward.6} parent=146 // pred_region
          _
        $region151: #{bgb_gcn_forward.6} parent=146 // pred_fallthru
          _
        %s517 = sand.u32 %s61, 1
        %s518 = sand.u32 %s61, 1
        %s519 = smul.addr %s518, 64
        %s520 = scalar_lea.vmem [#allocation4], %s519
        // Predicated region
        $region152: #{bgb_gcn_forward.6} parent=146 // pred_check
          %p521 = pneg %p74
        $region153: #{bgb_gcn_forward.6} parent=146 // pred_check_branch
          %523 = sbr.rel (%p521) target = $region155
        $region154: #{bgb_gcn_forward.6} parent=146 // pred_region
          _
        $region155: #{bgb_gcn_forward.6} parent=146 // pred_fallthru
          _
        %s524 = sand.u32 %s89, 1
        %s525 = sand.u32 %s89, 1
        %s526 = smul.addr %s525, 64
        %s527 = scalar_lea.vmem [#allocation5], %s526
        // Predicated region
        $region156: #{bgb_gcn_forward.6} parent=146 // pred_check
          %p528 = pneg %p102
        $region157: #{bgb_gcn_forward.6} parent=146 // pred_check_branch
          %530 = sbr.rel (%p528) target = $region159
        $region158: #{bgb_gcn_forward.6} parent=146 // pred_region
          _
        $region159: #{bgb_gcn_forward.6} parent=146 // pred_fallthru
          _
        %s531 = sand.u32 %s35, 1
        %s532 = sand.u32 %s35, 1
        %s533 = smul.addr %s532, 64
        %s534 = scalar_lea.vmem [#allocation3], %s533
        %p535 = pneg %p48
        %p536 = pneg %p45
        %s537 = sand.u32 %s61, 1
        %s538 = sand.u32 %s61, 1
        %s539 = smul.addr %s538, 64
        %s540 = scalar_lea.vmem [#allocation4], %s539
        %p541 = pneg %p74
        %p542 = pneg %p71
        %s543 = sand.u32 %s89, 1
        %s544 = sand.u32 %s89, 1
        %s545 = smul.addr %s544, 64
        %s546 = scalar_lea.vmem [#allocation5], %s545
        %p547 = pneg %p102
        %p548 = pneg %p99
        %p549 = pneg %p123
        %p550 = pneg %p120
        %p551 = pneg %p149
        %p552 = pneg %p146
        %s553 = smul.u32 16, %s19
        %p554 = scmp.lt.s32.totalorder %s553, 31
        %s555 = scalar_select %p554, %s553, 31
        %s556 = smul.addr %s555, 4
        %s557 = scalar_lea.vmem %s4, %s556
        %s558 = smul.u32 16, %s19
        %s559 = smul.u32 16, %s20
        %s560 = smul.u32 16, %s19
        %s561 = smul.u32 16, %s19
        %p562 = scmp.lt.s32.totalorder %s561, 31
        %s563 = scalar_select %p562, %s561, 31
        %s564 = smul.addr %s563, 4
        %s565 = scalar_lea.vmem %s4, %s564
        %s566 = smul.u32 16, %s19
        %p568 = scmp.eq.s32.totalorder %s20, 0
        // Predicated region
        $region160: #{bgb_gcn_forward.6} parent=146 // pred_check
          %p569 = pneg %p568
        $region161: #{bgb_gcn_forward.6} parent=146 // pred_check_branch
          %571 = sbr.rel (%p569) target = $region163
        $region162: #{bgb_gcn_forward.6} parent=146 // pred_region
          %v572 = vld [vmem:[%s513] sm:$0xf]
          %v573 = vld [vmem:[%s513 + $0x4] sm:$0xf]
          %v574 = vld [vmem:[%s513 + $0x8] sm:$0xf]
          %v575 = vld [vmem:[%s513 + $0xc] sm:$0xf]
          %v576 = vld [vmem:[%s513 + $0x10] sm:$0xf]
          %v577 = vld [vmem:[%s513 + $0x14] sm:$0xf]
          %v578 = vld [vmem:[%s513 + $0x18] sm:$0xf]
          %v579 = vld [vmem:[%s513 + $0x1c] sm:$0xf]
          %v580 = vld [vmem:[%s513 + $0x20] sm:$0xf]
          %v581 = vld [vmem:[%s513 + $0x24] sm:$0xf]
          %v582 = vld [vmem:[%s513 + $0x28] sm:$0xf]
          %v583 = vld [vmem:[%s513 + $0x2c] sm:$0xf]
          %v584 = vld [vmem:[%s513 + $0x30] sm:$0xf]
          %v585 = vld [vmem:[%s513 + $0x34] sm:$0xf]
          %v586 = vld [vmem:[%s513 + $0x38] sm:$0xf]
          %v587 = vld [vmem:[%s513 + $0x3c] sm:$0xf]
          %v588 = vunpack.c.l.bf16 %v572
          %v589 = vunpack.c.l.bf16 %v573
          %v590 = vunpack.c.l.bf16 %v574
          %v591 = vunpack.c.l.bf16 %v575
          %v592 = vunpack.c.l.bf16 %v576
          %v593 = vunpack.c.l.bf16 %v577
          %v594 = vunpack.c.l.bf16 %v578
          %v595 = vunpack.c.l.bf16 %v579
          %v596 = vunpack.c.l.bf16 %v580
          %v597 = vunpack.c.l.bf16 %v581
          %v598 = vunpack.c.l.bf16 %v582
          %v599 = vunpack.c.l.bf16 %v583
          %v600 = vunpack.c.l.bf16 %v584
          %v601 = vunpack.c.l.bf16 %v585
          %v602 = vunpack.c.l.bf16 %v586
          %v603 = vunpack.c.l.bf16 %v587
          %604 = vst [vmem:[#allocation2] sm:$0xff] %v588
          %605 = vst [vmem:[#allocation2 + $0x8] sm:$0xff] %v589
          %606 = vst [vmem:[#allocation2 + $0x10] sm:$0xff] %v590
          %607 = vst [vmem:[#allocation2 + $0x18] sm:$0xff] %v591
          %608 = vst [vmem:[#allocation2 + $0x20] sm:$0xff] %v592
          %609 = vst [vmem:[#allocation2 + $0x28] sm:$0xff] %v593
          %610 = vst [vmem:[#allocation2 + $0x30] sm:$0xff] %v594
          %611 = vst [vmem:[#allocation2 + $0x38] sm:$0xff] %v595
          %612 = vst [vmem:[#allocation2 + $0x40] sm:$0xff] %v596
          %613 = vst [vmem:[#allocation2 + $0x48] sm:$0xff] %v597
          %614 = vst [vmem:[#allocation2 + $0x50] sm:$0xff] %v598
          %615 = vst [vmem:[#allocation2 + $0x58] sm:$0xff] %v599
          %616 = vst [vmem:[#allocation2 + $0x60] sm:$0xff] %v600
          %617 = vst [vmem:[#allocation2 + $0x68] sm:$0xff] %v601
          %618 = vst [vmem:[#allocation2 + $0x70] sm:$0xff] %v602
          %619 = vst [vmem:[#allocation2 + $0x78] sm:$0xff] %v603
        $region163: #{bgb_gcn_forward.6} parent=146 // pred_fallthru
          _
        %v620 = vld [vmem:[#allocation2] sm:$0xff]
        %v621 = vld [vmem:[#allocation2 + $0x8] sm:$0xff]
        %v622 = vld [vmem:[#allocation2 + $0x10] sm:$0xff]
        %v623 = vld [vmem:[#allocation2 + $0x18] sm:$0xff]
        %v624 = vld [vmem:[#allocation2 + $0x20] sm:$0xff]
        %v625 = vld [vmem:[#allocation2 + $0x28] sm:$0xff]
        %v626 = vld [vmem:[#allocation2 + $0x30] sm:$0xff]
        %v627 = vld [vmem:[#allocation2 + $0x38] sm:$0xff]
        %v628 = vld [vmem:[#allocation2 + $0x40] sm:$0xff]
        %v629 = vld [vmem:[#allocation2 + $0x48] sm:$0xff]
        %v630 = vld [vmem:[#allocation2 + $0x50] sm:$0xff]
        %v631 = vld [vmem:[#allocation2 + $0x58] sm:$0xff]
        %v632 = vld [vmem:[#allocation2 + $0x60] sm:$0xff]
        %v633 = vld [vmem:[#allocation2 + $0x68] sm:$0xff]
        %v634 = vld [vmem:[#allocation2 + $0x70] sm:$0xff]
        %v635 = vld [vmem:[#allocation2 + $0x78] sm:$0xff]
        %v636 = vld [vmem:[%s527] sm:$0xf]
        %v637 = vld [vmem:[%s527 + $0x4] sm:$0xf]
        %v638 = vld [vmem:[%s527 + $0x8] sm:$0xf]
        %v639 = vld [vmem:[%s527 + $0xc] sm:$0xf]
        %v640 = vld [vmem:[%s527 + $0x10] sm:$0xf]
        %v641 = vld [vmem:[%s527 + $0x14] sm:$0xf]
        %v642 = vld [vmem:[%s527 + $0x18] sm:$0xf]
        %v643 = vld [vmem:[%s527 + $0x1c] sm:$0xf]
        %v644 = vld [vmem:[%s527 + $0x20] sm:$0xf]
        %v645 = vld [vmem:[%s527 + $0x24] sm:$0xf]
        %v646 = vld [vmem:[%s527 + $0x28] sm:$0xf]
        %v647 = vld [vmem:[%s527 + $0x2c] sm:$0xf]
        %v648 = vld [vmem:[%s527 + $0x30] sm:$0xf]
        %v649 = vld [vmem:[%s527 + $0x34] sm:$0xf]
        %v650 = vld [vmem:[%s527 + $0x38] sm:$0xf]
        %v651 = vld [vmem:[%s527 + $0x3c] sm:$0xf]
        %v652 = vld [vmem:[%s520] sm:$0xf]
        %v653 = vld [vmem:[%s520 + $0x4] sm:$0xf]
        %v654 = vld [vmem:[%s520 + $0x8] sm:$0xf]
        %v655 = vld [vmem:[%s520 + $0xc] sm:$0xf]
        %v656 = vld [vmem:[%s520 + $0x10] sm:$0xf]
        %v657 = vld [vmem:[%s520 + $0x14] sm:$0xf]
        %v658 = vld [vmem:[%s520 + $0x18] sm:$0xf]
        %v659 = vld [vmem:[%s520 + $0x1c] sm:$0xf]
        %v660 = vld [vmem:[%s520 + $0x20] sm:$0xf]
        %v661 = vld [vmem:[%s520 + $0x24] sm:$0xf]
        %v662 = vld [vmem:[%s520 + $0x28] sm:$0xf]
        %v663 = vld [vmem:[%s520 + $0x2c] sm:$0xf]
        %v664 = vld [vmem:[%s520 + $0x30] sm:$0xf]
        %v665 = vld [vmem:[%s520 + $0x34] sm:$0xf]
        %v666 = vld [vmem:[%s520 + $0x38] sm:$0xf]
        %v667 = vld [vmem:[%s520 + $0x3c] sm:$0xf]
        %v684 = vunpack.c.l.b16 %v636
        %v685 = vunpack.c.l.b16 %v637
        %v686 = vunpack.c.l.b16 %v638
        %v687 = vunpack.c.l.b16 %v639
        %v688 = vunpack.c.l.b16 %v640
        %v689 = vunpack.c.l.b16 %v641
        %v690 = vunpack.c.l.b16 %v642
        %v691 = vunpack.c.l.b16 %v643
        %v692 = vunpack.c.l.b16 %v644
        %v693 = vunpack.c.l.b16 %v645
        %v694 = vunpack.c.l.b16 %v646
        %v695 = vunpack.c.l.b16 %v647
        %v696 = vunpack.c.l.b16 %v648
        %v697 = vunpack.c.l.b16 %v649
        %v698 = vunpack.c.l.b16 %v650
        %v699 = vunpack.c.l.b16 %v651
        %v700 = vpack.c.b16 %v685, %v684
        %v701 = vpack.c.b16 %v687, %v686
        %v702 = vpack.c.b16 %v689, %v688
        %v703 = vpack.c.b16 %v691, %v690
        %v704 = vpack.c.b16 %v693, %v692
        %v705 = vpack.c.b16 %v695, %v694
        %v706 = vpack.c.b16 %v697, %v696
        %v707 = vpack.c.b16 %v699, %v698
        %v732 = vunpack.c.l.b16 %v652
        %v733 = vunpack.c.l.b16 %v653
        %v734 = vunpack.c.l.b16 %v654
        %v735 = vunpack.c.l.b16 %v655
        %v736 = vunpack.c.l.b16 %v656
        %v737 = vunpack.c.l.b16 %v657
        %v738 = vunpack.c.l.b16 %v658
        %v739 = vunpack.c.l.b16 %v659
        %v740 = vunpack.c.l.b16 %v660
        %v741 = vunpack.c.l.b16 %v661
        %v742 = vunpack.c.l.b16 %v662
        %v743 = vunpack.c.l.b16 %v663
        %v744 = vunpack.c.l.b16 %v664
        %v745 = vunpack.c.l.b16 %v665
        %v746 = vunpack.c.l.b16 %v666
        %v747 = vunpack.c.l.b16 %v667
        %v748 = vpack.c.b16 %v733, %v732
        %v749 = vpack.c.b16 %v735, %v734
        %v750 = vpack.c.b16 %v737, %v736
        %v751 = vpack.c.b16 %v739, %v738
        %v752 = vpack.c.b16 %v741, %v740
        %v753 = vpack.c.b16 %v743, %v742
        %v754 = vpack.c.b16 %v745, %v744
        %v755 = vpack.c.b16 %v747, %v746
        %764 = vmatprep.subr.bf16.mxu0 0
        %765 = vmatpush1.bf16.msra.mxu0 %v748
        %766 = vmatprep.subr.bf16.mxu0 0
        %767 = vmatpush1.bf16.msra.mxu0 %v749
        %768 = vmatprep.subr.bf16.mxu0 0
        %769 = vmatpush1.bf16.msra.mxu0 %v750
        %770 = vmatprep.subr.bf16.mxu0 0
        %771 = vmatpush1.bf16.msra.mxu0 %v751
        %772 = vmatprep.subr.bf16.mxu0 0
        %773 = vmatpush1.bf16.msra.mxu0 %v752
        %774 = vmatprep.subr.bf16.mxu0 0
        %775 = vmatpush1.bf16.msra.mxu0 %v753
        %776 = vmatprep.subr.bf16.mxu0 0
        %777 = vmatpush1.bf16.msra.mxu0 %v754
        %778 = vmatprep.subr.bf16.mxu0 0
        %779 = vmatpush1.bf16.msra.mxu0 %v755
        %780 = vmatprep.subr.bf16.mxu0 0
        %781 = vmatpush1.bf16.msra.mxu0 0
        %782 = vmatprep.subr.bf16.mxu0 0
        %783 = vmatpush1.bf16.msra.mxu0 0
        %784 = vmatprep.subr.bf16.mxu0 0
        %785 = vmatpush1.bf16.msra.mxu0 0
        %786 = vmatprep.subr.bf16.mxu0 0
        %787 = vmatpush1.bf16.msra.mxu0 0
        %788 = vmatprep.subr.bf16.mxu0 0
        %789 = vmatpush1.bf16.msra.mxu0 0
        %790 = vmatprep.subr.bf16.mxu0 0
        %791 = vmatpush1.bf16.msra.mxu0 0
        %792 = vmatprep.subr.bf16.mxu0 0
        %793 = vmatpush1.bf16.msra.mxu0 0
        %794 = vmatprep.subr.bf16.mxu0 0
        %795 = vmatpush1.bf16.msra.mxu0 0
        %796 = vmatprep.mubr.bf16.mxu0 0
        %797 = vmatmul.mubr.bf16.gmra.mrb[0].mxu0 %v700
        %v798 = vpop.f32.mrb[0].mxu0
        %v799 = vadd.f32 0.0, %v798
        %v800 = vpop.f32.mrb[0].mxu0
        %v801 = vpop.f32.mrb[0].mxu0
        %v802 = vadd.f32 0.0, %v801
        %v803 = vpop.f32.mrb[0].mxu0
        %804 = vmatprep.mubr.bf16.mxu0 0
        %805 = vmatmul.mubr.bf16.gmra.mrb[0].mxu0 %v701
        %v806 = vpop.f32.mrb[0].mxu0
        %v807 = vadd.f32 0.0, %v806
        %v808 = vpop.f32.mrb[0].mxu0
        %v809 = vpop.f32.mrb[0].mxu0
        %v810 = vadd.f32 0.0, %v809
        %v811 = vpop.f32.mrb[0].mxu0
        %812 = vmatprep.mubr.bf16.mxu0 0
        %813 = vmatmul.mubr.bf16.gmra.mrb[0].mxu0 %v702
        %v814 = vpop.f32.mrb[0].mxu0
        %v815 = vadd.f32 0.0, %v814
        %v816 = vpop.f32.mrb[0].mxu0
        %v817 = vpop.f32.mrb[0].mxu0
        %v818 = vadd.f32 0.0, %v817
        %v819 = vpop.f32.mrb[0].mxu0
        %820 = vmatprep.mubr.bf16.mxu0 0
        %821 = vmatmul.mubr.bf16.gmra.mrb[0].mxu0 %v703
        %v822 = vpop.f32.mrb[0].mxu0
        %v823 = vadd.f32 0.0, %v822
        %v824 = vpop.f32.mrb[0].mxu0
        %v825 = vpop.f32.mrb[0].mxu0
        %v826 = vadd.f32 0.0, %v825
        %v827 = vpop.f32.mrb[0].mxu0
        %828 = vmatprep.mubr.bf16.mxu0 0
        %829 = vmatmul.mubr.bf16.gmra.mrb[0].mxu0 %v704
        %v830 = vpop.f32.mrb[0].mxu0
        %v831 = vadd.f32 0.0, %v830
        %v832 = vpop.f32.mrb[0].mxu0
        %v833 = vpop.f32.mrb[0].mxu0
        %v834 = vadd.f32 0.0, %v833
        %v835 = vpop.f32.mrb[0].mxu0
        %836 = vmatprep.mubr.bf16.mxu0 0
        %837 = vmatmul.mubr.bf16.gmra.mrb[0].mxu0 %v705
        %v838 = vpop.f32.mrb[0].mxu0
        %v839 = vadd.f32 0.0, %v838
        %v840 = vpop.f32.mrb[0].mxu0
        %v841 = vpop.f32.mrb[0].mxu0
        %v842 = vadd.f32 0.0, %v841
        %v843 = vpop.f32.mrb[0].mxu0
        %844 = vmatprep.mubr.bf16.mxu0 0
        %845 = vmatmul.mubr.bf16.gmra.mrb[0].mxu0 %v706
        %v846 = vpop.f32.mrb[0].mxu0
        %v847 = vadd.f32 0.0, %v846
        %v848 = vpop.f32.mrb[0].mxu0
        %v849 = vpop.f32.mrb[0].mxu0
        %v850 = vadd.f32 0.0, %v849
        %v851 = vpop.f32.mrb[0].mxu0
        %852 = vmatprep.mubr.bf16.mxu0 0
        %853 = vmatmul.mubr.bf16.gmra.mrb[0].mxu0 %v707
        %v854 = vpop.f32.mrb[0].mxu0
        %v855 = vadd.f32 0.0, %v854
        %v856 = vpop.f32.mrb[0].mxu0
        %v857 = vpop.f32.mrb[0].mxu0
        %v858 = vadd.f32 0.0, %v857
        %v859 = vpop.f32.mrb[0].mxu0
        %860 = vdwg.mxu0
        %v861 = vadd.f32 %v620, %v799
        %v862 = vadd.f32 %v621, %v802
        %v863 = vadd.f32 %v622, %v807
        %v864 = vadd.f32 %v623, %v810
        %v865 = vadd.f32 %v624, %v815
        %v866 = vadd.f32 %v625, %v818
        %v867 = vadd.f32 %v626, %v823
        %v868 = vadd.f32 %v627, %v826
        %v869 = vadd.f32 %v628, %v831
        %v870 = vadd.f32 %v629, %v834
        %v871 = vadd.f32 %v630, %v839
        %v872 = vadd.f32 %v631, %v842
        %v873 = vadd.f32 %v632, %v847
        %v874 = vadd.f32 %v633, %v850
        %v875 = vadd.f32 %v634, %v855
        %v876 = vadd.f32 %v635, %v858
        %877 = vst [vmem:[#allocation2] sm:$0xff] %v861
        %878 = vst [vmem:[#allocation2 + $0x8] sm:$0xff] %v862
        %879 = vst [vmem:[#allocation2 + $0x10] sm:$0xff] %v863
        %880 = vst [vmem:[#allocation2 + $0x18] sm:$0xff] %v864
        %881 = vst [vmem:[#allocation2 + $0x20] sm:$0xff] %v865
        %882 = vst [vmem:[#allocation2 + $0x28] sm:$0xff] %v866
        %883 = vst [vmem:[#allocation2 + $0x30] sm:$0xff] %v867
        %884 = vst [vmem:[#allocation2 + $0x38] sm:$0xff] %v868
        %885 = vst [vmem:[#allocation2 + $0x40] sm:$0xff] %v869
        %886 = vst [vmem:[#allocation2 + $0x48] sm:$0xff] %v870
        %887 = vst [vmem:[#allocation2 + $0x50] sm:$0xff] %v871
        %888 = vst [vmem:[#allocation2 + $0x58] sm:$0xff] %v872
        %889 = vst [vmem:[#allocation2 + $0x60] sm:$0xff] %v873
        %890 = vst [vmem:[#allocation2 + $0x68] sm:$0xff] %v874
        %891 = vst [vmem:[#allocation2 + $0x70] sm:$0xff] %v875
        %892 = vst [vmem:[#allocation2 + $0x78] sm:$0xff] %v876
        %p893 = scmp.eq.s32.totalorder %s20, 1
        // Predicated region
        $region164: #{bgb_gcn_forward.6} parent=146 // pred_check
          %p894 = pneg %p893
        $region165: #{bgb_gcn_forward.6} parent=146 // pred_check_branch
          %896 = sbr.rel (%p894) target = $region167
        $region166: #{bgb_gcn_forward.6} parent=146 // pred_region
          %v897 = vld [vmem:[#allocation2] sm:$0xff]
          %v898 = vld [vmem:[#allocation2 + $0x8] sm:$0xff]
          %v899 = vld [vmem:[#allocation2 + $0x10] sm:$0xff]
          %v900 = vld [vmem:[#allocation2 + $0x18] sm:$0xff]
          %v901 = vld [vmem:[#allocation2 + $0x20] sm:$0xff]
          %v902 = vld [vmem:[#allocation2 + $0x28] sm:$0xff]
          %v903 = vld [vmem:[#allocation2 + $0x30] sm:$0xff]
          %v904 = vld [vmem:[#allocation2 + $0x38] sm:$0xff]
          %v905 = vld [vmem:[#allocation2 + $0x40] sm:$0xff]
          %v906 = vld [vmem:[#allocation2 + $0x48] sm:$0xff]
          %v907 = vld [vmem:[#allocation2 + $0x50] sm:$0xff]
          %v908 = vld [vmem:[#allocation2 + $0x58] sm:$0xff]
          %v909 = vld [vmem:[#allocation2 + $0x60] sm:$0xff]
          %v910 = vld [vmem:[#allocation2 + $0x68] sm:$0xff]
          %v911 = vld [vmem:[#allocation2 + $0x70] sm:$0xff]
          %v912 = vld [vmem:[#allocation2 + $0x78] sm:$0xff]
          %v913 = vld [vmem:[%s3] sm:$0x1]
          %v914 = vlaneseq
          %v915 = vshrl.u32 %v914, 7
          %v916 = vsub.s32 0, %v915
          %v917 = vrot.slane %v913, %v916
          %v918 = vadd.f32 %v897, %v917
          %v919 = vadd.f32 %v898, %v917
          %v920 = vadd.f32 %v899, %v917
          %v921 = vadd.f32 %v900, %v917
          %v922 = vadd.f32 %v901, %v917
          %v923 = vadd.f32 %v902, %v917
          %v924 = vadd.f32 %v903, %v917
          %v925 = vadd.f32 %v904, %v917
          %v926 = vadd.f32 %v905, %v917
          %v927 = vadd.f32 %v906, %v917
          %v928 = vadd.f32 %v907, %v917
          %v929 = vadd.f32 %v908, %v917
          %v930 = vadd.f32 %v909, %v917
          %v931 = vadd.f32 %v910, %v917
          %v932 = vadd.f32 %v911, %v917
          %v933 = vadd.f32 %v912, %v917
          %vm934 = vcmp.ge.f32.partialorder %v918, 0.0
          %vm935 = vcmp.ge.f32.partialorder %v919, 0.0
          %vm936 = vcmp.ge.f32.partialorder %v920, 0.0
          %vm937 = vcmp.ge.f32.partialorder %v921, 0.0
          %vm938 = vcmp.ge.f32.partialorder %v922, 0.0
          %vm939 = vcmp.ge.f32.partialorder %v923, 0.0
          %vm940 = vcmp.ge.f32.partialorder %v924, 0.0
          %vm941 = vcmp.ge.f32.partialorder %v925, 0.0
          %vm942 = vcmp.ge.f32.partialorder %v926, 0.0
          %vm943 = vcmp.ge.f32.partialorder %v927, 0.0
          %vm944 = vcmp.ge.f32.partialorder %v928, 0.0
          %vm945 = vcmp.ge.f32.partialorder %v929, 0.0
          %vm946 = vcmp.ge.f32.partialorder %v930, 0.0
          %vm947 = vcmp.ge.f32.partialorder %v931, 0.0
          %vm948 = vcmp.ge.f32.partialorder %v932, 0.0
          %vm949 = vcmp.ge.f32.partialorder %v933, 0.0
          %v950 = vmul.f32 %v918, 0.2
          %v951 = vmul.f32 %v919, 0.2
          %v952 = vmul.f32 %v920, 0.2
          %v953 = vmul.f32 %v921, 0.2
          %v954 = vmul.f32 %v922, 0.2
          %v955 = vmul.f32 %v923, 0.2
          %v956 = vmul.f32 %v924, 0.2
          %v957 = vmul.f32 %v925, 0.2
          %v958 = vmul.f32 %v926, 0.2
          %v959 = vmul.f32 %v927, 0.2
          %v960 = vmul.f32 %v928, 0.2
          %v961 = vmul.f32 %v929, 0.2
          %v962 = vmul.f32 %v930, 0.2
          %v963 = vmul.f32 %v931, 0.2
          %v964 = vmul.f32 %v932, 0.2
          %v965 = vmul.f32 %v933, 0.2
          %v966 = vsel %vm934, %v918, %v950
          %v967 = vsel %vm935, %v919, %v951
          %v968 = vsel %vm936, %v920, %v952
          %v969 = vsel %vm937, %v921, %v953
          %v970 = vsel %vm938, %v922, %v954
          %v971 = vsel %vm939, %v923, %v955
          %v972 = vsel %vm940, %v924, %v956
          %v973 = vsel %vm941, %v925, %v957
          %v974 = vsel %vm942, %v926, %v958
          %v975 = vsel %vm943, %v927, %v959
          %v976 = vsel %vm944, %v928, %v960
          %v977 = vsel %vm945, %v929, %v961
          %v978 = vsel %vm946, %v930, %v962
          %v979 = vsel %vm947, %v931, %v963
          %v980 = vsel %vm948, %v932, %v964
          %v981 = vsel %vm949, %v933, %v965
          %v982 = vld [vmem:[%s3 + $0x1] sm:$0x1]
          %v983 = vlaneseq
          %v984 = vshrl.u32 %v983, 7
          %v985 = vsub.s32 0, %v984
          %v986 = vrot.slane %v982, %v985
          %v987 = vmul.f32 %v966, %v986
          %v988 = vmul.f32 %v967, %v986
          %v989 = vmul.f32 %v968, %v986
          %v990 = vmul.f32 %v969, %v986
          %v991 = vmul.f32 %v970, %v986
          %v992 = vmul.f32 %v971, %v986
          %v993 = vmul.f32 %v972, %v986
          %v994 = vmul.f32 %v973, %v986
          %v995 = vmul.f32 %v974, %v986
          %v996 = vmul.f32 %v975, %v986
          %v997 = vmul.f32 %v976, %v986
          %v998 = vmul.f32 %v977, %v986
          %v999 = vmul.f32 %v978, %v986
          %v1000 = vmul.f32 %v979, %v986
          %v1001 = vmul.f32 %v980, %v986
          %v1002 = vmul.f32 %v981, %v986
          %v1003 = vld [vmem:[%s3 + $0x2] sm:$0x1]
          %v1004 = vlaneseq
          %v1005 = vshrl.u32 %v1004, 7
          %v1006 = vsub.s32 0, %v1005
          %v1007 = vrot.slane %v1003, %v1006
          %v1008 = vadd.f32 %v987, %v1007
          %v1009 = vadd.f32 %v988, %v1007
          %v1010 = vadd.f32 %v989, %v1007
          %v1011 = vadd.f32 %v990, %v1007
          %v1012 = vadd.f32 %v991, %v1007
          %v1013 = vadd.f32 %v992, %v1007
          %v1014 = vadd.f32 %v993, %v1007
          %v1015 = vadd.f32 %v994, %v1007
          %v1016 = vadd.f32 %v995, %v1007
          %v1017 = vadd.f32 %v996, %v1007
          %v1018 = vadd.f32 %v997, %v1007
          %v1019 = vadd.f32 %v998, %v1007
          %v1020 = vadd.f32 %v999, %v1007
          %v1021 = vadd.f32 %v1000, %v1007
          %v1022 = vadd.f32 %v1001, %v1007
          %v1023 = vadd.f32 %v1002, %v1007
          %v1024 = vpack.c.bf16 %v1009, %v1008
          %v1025 = vpack.c.bf16 %v1011, %v1010
          %v1026 = vpack.c.bf16 %v1013, %v1012
          %v1027 = vpack.c.bf16 %v1015, %v1014
          %v1028 = vpack.c.bf16 %v1017, %v1016
          %v1029 = vpack.c.bf16 %v1019, %v1018
          %v1030 = vpack.c.bf16 %v1021, %v1020
          %v1031 = vpack.c.bf16 %v1023, %v1022
          %v1040 = vunpack.c.l.b16 %v1024
          %v1041 = vunpack.c.h.b16 %v1024
          %v1042 = vunpack.c.l.b16 %v1025
          %v1043 = vunpack.c.h.b16 %v1025
          %v1044 = vunpack.c.l.b16 %v1026
          %v1045 = vunpack.c.h.b16 %v1026
          %v1046 = vunpack.c.l.b16 %v1027
          %v1047 = vunpack.c.h.b16 %v1027
          %v1048 = vunpack.c.l.b16 %v1028
          %v1049 = vunpack.c.h.b16 %v1028
          %v1050 = vunpack.c.l.b16 %v1029
          %v1051 = vunpack.c.h.b16 %v1029
          %v1052 = vunpack.c.l.b16 %v1030
          %v1053 = vunpack.c.h.b16 %v1030
          %v1054 = vunpack.c.l.b16 %v1031
          %v1055 = vunpack.c.h.b16 %v1031
          %v1056 = vpack.c.b16 %v1040, %v1040
          %v1057 = vpack.c.b16 %v1041, %v1041
          %v1058 = vpack.c.b16 %v1042, %v1042
          %v1059 = vpack.c.b16 %v1043, %v1043
          %v1060 = vpack.c.b16 %v1044, %v1044
          %v1061 = vpack.c.b16 %v1045, %v1045
          %v1062 = vpack.c.b16 %v1046, %v1046
          %v1063 = vpack.c.b16 %v1047, %v1047
          %v1064 = vpack.c.b16 %v1048, %v1048
          %v1065 = vpack.c.b16 %v1049, %v1049
          %v1066 = vpack.c.b16 %v1050, %v1050
          %v1067 = vpack.c.b16 %v1051, %v1051
          %v1068 = vpack.c.b16 %v1052, %v1052
          %v1069 = vpack.c.b16 %v1053, %v1053
          %v1070 = vpack.c.b16 %v1054, %v1054
          %v1071 = vpack.c.b16 %v1055, %v1055
          %1088 = vst [vmem:[%s565] sm:$0xf] %v1056
          %1089 = vst [vmem:[%s565 + $0x4] sm:$0xf] %v1057
          %1090 = vst [vmem:[%s565 + $0x8] sm:$0xf] %v1058
          %1091 = vst [vmem:[%s565 + $0xc] sm:$0xf] %v1059
          %1092 = vst [vmem:[%s565 + $0x10] sm:$0xf] %v1060
          %1093 = vst [vmem:[%s565 + $0x14] sm:$0xf] %v1061
          %1094 = vst [vmem:[%s565 + $0x18] sm:$0xf] %v1062
          %1095 = vst [vmem:[%s565 + $0x1c] sm:$0xf] %v1063
          %1096 = vst [vmem:[%s565 + $0x20] sm:$0xf] %v1064
          %1097 = vst [vmem:[%s565 + $0x24] sm:$0xf] %v1065
          %1098 = vst [vmem:[%s565 + $0x28] sm:$0xf] %v1066
          %1099 = vst [vmem:[%s565 + $0x2c] sm:$0xf] %v1067
          %1100 = vst [vmem:[%s565 + $0x30] sm:$0xf] %v1068
          %1101 = vst [vmem:[%s565 + $0x34] sm:$0xf] %v1069
          %1102 = vst [vmem:[%s565 + $0x38] sm:$0xf] %v1070
          %1103 = vst [vmem:[%s565 + $0x3c] sm:$0xf] %v1071
        $region167: #{bgb_gcn_forward.6} parent=146 // pred_fallthru
          _
        %s1104 = smul.u32 16, %s19
        %p1105 = scmp.lt.s32.totalorder %s1104, 31
        %s1106 = scalar_select %p1105, %s1104, 31
        %s1107 = smul.addr %s1106, 4
        %s1108 = scalar_lea.vmem %s4, %s1107
        // Predicated region
        $region168: #{bgb_gcn_forward.6} parent=146 // pred_check
          %p1109 = pneg %p146
        $region169: #{bgb_gcn_forward.6} parent=146 // pred_check_branch
          %1111 = sbr.rel (%p1109) target = $region171
        $region170: #{bgb_gcn_forward.6} parent=146 // pred_region
          %s1112 = smul.u32 16, %s19
        $region171: #{bgb_gcn_forward.6} parent=146 // pred_fallthru
          _
      $region147: #{bgb_gcn_forward.6} parent=5 // pred_fallthru
        _
      %p1113 = scmp.le.s32.totalorder 2, %s10
      // Predicated region
      $region172: #{bgb_gcn_forward.6} parent=5 // pred_check
        %p1114 = pneg %p1113
      $region173: #{bgb_gcn_forward.6} parent=5 // pred_check_branch
        %1116 = sbr.rel (%p1114) target = $region175
      $region174: #{bgb_gcn_forward.6} parent=5 // pred_region
        %s1117 = ssub.s32 %s10, 2
        // Predicated region
        $region176: #{bgb_gcn_forward.6} parent=174 // pred_check
          %p1118 = pneg %p152
        $region177: #{bgb_gcn_forward.6} parent=174 // pred_check_branch
          %1120 = sbr.rel (%p1118) target = $region179
        $region178: #{bgb_gcn_forward.6} parent=174 // pred_region
          %s1121 = smul.u32 16, %s21
          %p1122 = scmp.lt.s32.totalorder %s1121, 31
          %s1123 = scalar_select %p1122, %s1121, 31
          %s1124 = smul.addr %s1123, 4
          %s1125 = scalar_lea.vmem %s4, %s1124
        $region179: #{bgb_gcn_forward.6} parent=174 // pred_fallthru
          _
      $region175: #{bgb_gcn_forward.6} parent=5 // pred_fallthru
        _
    $region6: #{bgb_gcn_forward.6} parent=1 // loop_footer
      %s14 = sadd.s32 1, %s10
    $region7: #{bgb_gcn_forward.6} parent=1 // loop_footer_branch
      %9 = sbr.rel target = $region3
    $region8: #{bgb_gcn_forward.6} parent=1 // loop_exit
      _

// kernel: bgb_gcn_forward.9
$region0: #{bgb_gcn_forward.9}
  #allocation0 [shape = 'u32[]', space=smem, size = 0x4, offset = 0x4, fixed_abs, tag = 'smem constant byte address 0x4 - core index']
  #allocation1 [shape = 'u32[144,128]{1,0:T(1,128)}', space=vmem, size = 0x12000, scoped, tag = 'internal scratch']
  #allocation2 [shape = 'f32[8,128]{1,0:T(8,128)}', space=vmem, size = 0x1000, scoped, tag = 'scratch operand']
  %s0 = inlined_call_operand.vmem [shape: bf16[8,256], index: 0, kind: input, shape index: {}]
  %s1 = inlined_call_operand.vmem [shape: bf16[256,128], index: 1, kind: input, shape index: {}]
  %s2 = inlined_call_operand.vmem [shape: f32[8,1], index: 2, kind: input, shape index: {}]
  %s3 = inlined_call_operand.vmem [shape: bf16[128,128], index: 3, kind: input, shape index: {}]
  %s4 = inlined_call_operand.vmem [shape: f32[1,128], index: 4, kind: input, shape index: {}]
  %s5 = inlined_call_operand.vmem [shape: bf16[128,128], index: 5, kind: input, shape index: {}]
  %s6 = inlined_call_operand.vmem [shape: f32[1,128], index: 6, kind: input, shape index: {}]
  %s7 = inlined_call_operand.vmem [shape: f32[8,128], index: 7, kind: output, shape index: {}]
  %s8 = sld [smem:[#allocation0]]
  $region69: #{bgb_gcn_forward.9} parent=0
    _
  %s10 = ssub.s32 1, %s8
  %s11 = scalar_select 0, %s10, %s8
  loop: start=0, step=1, limit=4
  $region2: #{bgb_gcn_forward.9} parent=0 // loop_pre_header
    _
  $region3: #{bgb_gcn_forward.9} parent=0 // loop_header
    %s13 = sphi 0, %s17
    %p14 = scmp.ge.s32.totalorder %s13, 4
    %s23 = sphi 0, %s25
    %s26 = sphi 0, %s23
    %s27 = sphi 0, %s26
    %s43 = sphi 0, %s27
    %s49 = sphi 0, %s51
    %s52 = sphi 0, %s49
    %s53 = sphi 0, %s52
    %s69 = sphi 0, %s53
    %s73 = sphi 0, %s73
    %s75 = sphi 0, %s73
    %s76 = sphi 0, %s75
    %s90 = sphi 0, %s76
    %s94 = sphi 0, %s94
    %s96 = sphi 0, %s94
    %s97 = sphi 0, %s96
    %s111 = sphi 0, %s97
    %s115 = sphi 0, %s115
    %s117 = sphi 0, %s115
    %s118 = sphi 0, %s117
    %s132 = sphi 0, %s118
    %s136 = sphi 0, %s136
    %s138 = sphi 0, %s136
    %s139 = sphi 0, %s138
    %s153 = sphi 0, %s139
    %s157 = sphi 0, %s157
    %s159 = sphi 0, %s157
    %s160 = sphi 0, %s159
    %s174 = sphi 0, %s160
    %s178 = sphi 0, %s178
    %s180 = sphi 0, %s178
    %s181 = sphi 0, %s180
    %s195 = sphi 0, %s181
  $region4: #{bgb_gcn_forward.9} parent=0 // loop_header_branch
    %16 = sbr.rel (%p14) target = $region8
  $region5: #{bgb_gcn_forward.9} parent=0 // loop_body
    %s18 = ssub.s32 %s13, 1
    %s19 = ssub.s32 %s13, 2
    %s20 = sadd.s32 %s13, 1
    %s21 = ssub.s32 %s13, %s20
    %p22 = scmp.eq.s32.totalorder %s21, 0
    %s24 = sadd.s32 %s23, 1
    %s25 = scalar_select %p22, %s23, %s24
    %p28 = pneg %p22
    %p29 = scmp.eq.s32.totalorder %s13, 1
    %p30 = por %p28, %p29
    %p31 = scmp.ne.s32.totalorder %s23, %s26
    %p32 = scmp.eq.s32.totalorder %s13, 0
    %p33 = por %p31, %p32
    %p34 = scmp.ne.s32.totalorder %s23, %s26
    %p35 = scmp.eq.s32.totalorder %s18, 1
    %p36 = por %p34, %p35
    %p37 = scmp.ne.s32.totalorder %s26, %s27
    %p38 = scmp.eq.s32.totalorder %s18, 0
    %p39 = por %p37, %p38
    %p40 = scmp.ne.s32.totalorder %s26, %s27
    %p41 = scmp.eq.s32.totalorder %s19, 1
    %p42 = por %p40, %p41
    %p44 = scmp.ne.s32.totalorder %s27, %s43
    %p45 = scmp.eq.s32.totalorder %s19, 0
    %p46 = por %p44, %p45
    %s47 = ssub.s32 %s13, %s20
    %p48 = scmp.eq.s32.totalorder %s47, 0
    %s50 = sadd.s32 %s49, 1
    %s51 = scalar_select %p48, %s49, %s50
    %p54 = pneg %p48
    %p55 = scmp.eq.s32.totalorder %s13, 1
    %p56 = por %p54, %p55
    %p57 = scmp.ne.s32.totalorder %s49, %s52
    %p58 = scmp.eq.s32.totalorder %s13, 0
    %p59 = por %p57, %p58
    %p60 = scmp.ne.s32.totalorder %s49, %s52
    %p61 = scmp.eq.s32.totalorder %s18, 1
    %p62 = por %p60, %p61
    %p63 = scmp.ne.s32.totalorder %s52, %s53
    %p64 = scmp.eq.s32.totalorder %s18, 0
    %p65 = por %p63, %p64
    %p66 = scmp.ne.s32.totalorder %s52, %s53
    %p67 = scmp.eq.s32.totalorder %s19, 1
    %p68 = por %p66, %p67
    %p70 = scmp.ne.s32.totalorder %s53, %s69
    %p71 = scmp.eq.s32.totalorder %s19, 0
    %p72 = por %p70, %p71
    %s74 = sadd.s32 %s73, 1
    %p77 = scmp.eq.s32.totalorder %s13, 1
    %p78 = scmp.ne.s32.totalorder %s73, %s75
    %p79 = scmp.eq.s32.totalorder %s13, 0
    %p80 = por %p78, %p79
    %p81 = scmp.ne.s32.totalorder %s73, %s75
    %p82 = scmp.eq.s32.totalorder %s18, 1
    %p83 = por %p81, %p82
    %p84 = scmp.ne.s32.totalorder %s75, %s76
    %p85 = scmp.eq.s32.totalorder %s18, 0
    %p86 = por %p84, %p85
    %p87 = scmp.ne.s32.totalorder %s75, %s76
    %p88 = scmp.eq.s32.totalorder %s19, 1
    %p89 = por %p87, %p88
    %p91 = scmp.ne.s32.totalorder %s76, %s90
    %p92 = scmp.eq.s32.totalorder %s19, 0
    %p93 = por %p91, %p92
    %s95 = sadd.s32 %s94, 1
    %p98 = scmp.eq.s32.totalorder %s13, 1
    %p99 = scmp.ne.s32.totalorder %s94, %s96
    %p100 = scmp.eq.s32.totalorder %s13, 0
    %p101 = por %p99, %p100
    %p102 = scmp.ne.s32.totalorder %s94, %s96
    %p103 = scmp.eq.s32.totalorder %s18, 1
    %p104 = por %p102, %p103
    %p105 = scmp.ne.s32.totalorder %s96, %s97
    %p106 = scmp.eq.s32.totalorder %s18, 0
    %p107 = por %p105, %p106
    %p108 = scmp.ne.s32.totalorder %s96, %s97
    %p109 = scmp.eq.s32.totalorder %s19, 1
    %p110 = por %p108, %p109
    %p112 = scmp.ne.s32.totalorder %s97, %s111
    %p113 = scmp.eq.s32.totalorder %s19, 0
    %p114 = por %p112, %p113
    %s116 = sadd.s32 %s115, 1
    %p119 = scmp.eq.s32.totalorder %s13, 1
    %p120 = scmp.ne.s32.totalorder %s115, %s117
    %p121 = scmp.eq.s32.totalorder %s13, 0
    %p122 = por %p120, %p121
    %p123 = scmp.ne.s32.totalorder %s115, %s117
    %p124 = scmp.eq.s32.totalorder %s18, 1
    %p125 = por %p123, %p124
    %p126 = scmp.ne.s32.totalorder %s117, %s118
    %p127 = scmp.eq.s32.totalorder %s18, 0
    %p128 = por %p126, %p127
    %p129 = scmp.ne.s32.totalorder %s117, %s118
    %p130 = scmp.eq.s32.totalorder %s19, 1
    %p131 = por %p129, %p130
    %p133 = scmp.ne.s32.totalorder %s118, %s132
    %p134 = scmp.eq.s32.totalorder %s19, 0
    %p135 = por %p133, %p134
    %s137 = sadd.s32 %s136, 1
    %p140 = scmp.eq.s32.totalorder %s13, 1
    %p141 = scmp.ne.s32.totalorder %s136, %s138
    %p142 = scmp.eq.s32.totalorder %s13, 0
    %p143 = por %p141, %p142
    %p144 = scmp.ne.s32.totalorder %s136, %s138
    %p145 = scmp.eq.s32.totalorder %s18, 1
    %p146 = por %p144, %p145
    %p147 = scmp.ne.s32.totalorder %s138, %s139
    %p148 = scmp.eq.s32.totalorder %s18, 0
    %p149 = por %p147, %p148
    %p150 = scmp.ne.s32.totalorder %s138, %s139
    %p151 = scmp.eq.s32.totalorder %s19, 1
    %p152 = por %p150, %p151
    %p154 = scmp.ne.s32.totalorder %s139, %s153
    %p155 = scmp.eq.s32.totalorder %s19, 0
    %p156 = por %p154, %p155
    %s158 = sadd.s32 %s157, 1
    %p161 = scmp.eq.s32.totalorder %s13, 1
    %p162 = scmp.ne.s32.totalorder %s157, %s159
    %p163 = scmp.eq.s32.totalorder %s13, 0
    %p164 = por %p162, %p163
    %p165 = scmp.ne.s32.totalorder %s157, %s159
    %p166 = scmp.eq.s32.totalorder %s18, 1
    %p167 = por %p165, %p166
    %p168 = scmp.ne.s32.totalorder %s159, %s160
    %p169 = scmp.eq.s32.totalorder %s18, 0
    %p170 = por %p168, %p169
    %p171 = scmp.ne.s32.totalorder %s159, %s160
    %p172 = scmp.eq.s32.totalorder %s19, 1
    %p173 = por %p171, %p172
    %p175 = scmp.ne.s32.totalorder %s160, %s174
    %p176 = scmp.eq.s32.totalorder %s19, 0
    %p177 = por %p175, %p176
    %s179 = sadd.s32 %s178, 1
    %p182 = scmp.eq.s32.totalorder %s13, 1
    %p183 = scmp.ne.s32.totalorder %s178, %s180
    %p184 = scmp.eq.s32.totalorder %s13, 0
    %p185 = por %p183, %p184
    %p186 = scmp.ne.s32.totalorder %s178, %s180
    %p187 = scmp.eq.s32.totalorder %s18, 1
    %p188 = por %p186, %p187
    %p189 = scmp.ne.s32.totalorder %s180, %s181
    %p190 = scmp.eq.s32.totalorder %s18, 0
    %p191 = por %p189, %p190
    %p192 = scmp.ne.s32.totalorder %s180, %s181
    %p193 = scmp.eq.s32.totalorder %s19, 1
    %p194 = por %p192, %p193
    %p196 = scmp.ne.s32.totalorder %s181, %s195
    %p197 = scmp.eq.s32.totalorder %s19, 0
    %p198 = por %p196, %p197
    %p199 = scmp.le.s32.totalorder 1, %s13
    %p200 = scmp.lt.s32.totalorder %s13, 3
    %p201 = pnand %p199, %p200
    %p202 = pneg %p201
    // Predicated region
    $region9: #{bgb_gcn_forward.9} parent=5 // pred_check
      _
    $region10: #{bgb_gcn_forward.9} parent=5 // pred_check_branch
      %204 = sbr.rel (%p201) target = $region12
    $region11: #{bgb_gcn_forward.9} parent=5 // pred_region
      %s205 = ssub.s32 %s13, 1
      // Predicated region
      $region13: #{bgb_gcn_forward.9} parent=11 // pred_check
        %p206 = pneg %p86
      $region14: #{bgb_gcn_forward.9} parent=11 // pred_check_branch
        %208 = sbr.rel (%p206) target = $region16
      $region15: #{bgb_gcn_forward.9} parent=11 // pred_region
        _
      $region16: #{bgb_gcn_forward.9} parent=11 // pred_fallthru
        _
      // Predicated region
      $region17: #{bgb_gcn_forward.9} parent=11 // pred_check
        %p209 = pneg %p107
      $region18: #{bgb_gcn_forward.9} parent=11 // pred_check_branch
        %211 = sbr.rel (%p209) target = $region20
      $region19: #{bgb_gcn_forward.9} parent=11 // pred_region
        _
      $region20: #{bgb_gcn_forward.9} parent=11 // pred_fallthru
        _
      // Predicated region
      $region21: #{bgb_gcn_forward.9} parent=11 // pred_check
        %p212 = pneg %p128
      $region22: #{bgb_gcn_forward.9} parent=11 // pred_check_branch
        %214 = sbr.rel (%p212) target = $region24
      $region23: #{bgb_gcn_forward.9} parent=11 // pred_region
        _
      $region24: #{bgb_gcn_forward.9} parent=11 // pred_fallthru
        _
      // Predicated region
      $region25: #{bgb_gcn_forward.9} parent=11 // pred_check
        %p215 = pneg %p149
      $region26: #{bgb_gcn_forward.9} parent=11 // pred_check_branch
        %217 = sbr.rel (%p215) target = $region28
      $region27: #{bgb_gcn_forward.9} parent=11 // pred_region
        _
      $region28: #{bgb_gcn_forward.9} parent=11 // pred_fallthru
        _
      // Predicated region
      $region29: #{bgb_gcn_forward.9} parent=11 // pred_check
        %p218 = pneg %p170
      $region30: #{bgb_gcn_forward.9} parent=11 // pred_check_branch
        %220 = sbr.rel (%p218) target = $region32
      $region31: #{bgb_gcn_forward.9} parent=11 // pred_region
        _
      $region32: #{bgb_gcn_forward.9} parent=11 // pred_fallthru
        _
    $region12: #{bgb_gcn_forward.9} parent=5 // pred_fallthru
      _
    %p221 = scmp.lt.s32.totalorder %s13, 2
    // Predicated region
    $region33: #{bgb_gcn_forward.9} parent=5 // pred_check
      %p222 = pneg %p221
    $region34: #{bgb_gcn_forward.9} parent=5 // pred_check_branch
      %224 = sbr.rel (%p222) target = $region36
    $region35: #{bgb_gcn_forward.9} parent=5 // pred_region
      // Predicated region
      $region37: #{bgb_gcn_forward.9} parent=35 // pred_check
        %p225 = pneg %p33
      $region38: #{bgb_gcn_forward.9} parent=35 // pred_check_branch
        %227 = sbr.rel (%p225) target = $region40
      $region39: #{bgb_gcn_forward.9} parent=35 // pred_region
        %p228 = scmp.lt.s32.totalorder %s13, 1
        %s229 = scalar_select %p228, %s13, 1
        %s230 = smul.addr %s229, 4
        %s231 = scalar_lea.vmem %s0, %s230
      $region40: #{bgb_gcn_forward.9} parent=35 // pred_fallthru
        _
      // Predicated region
      $region41: #{bgb_gcn_forward.9} parent=35 // pred_check
        %p232 = pneg %p59
      $region42: #{bgb_gcn_forward.9} parent=35 // pred_check_branch
        %234 = sbr.rel (%p232) target = $region44
      $region43: #{bgb_gcn_forward.9} parent=35 // pred_region
        %s235 = smul.u32 16, %s13
        %p236 = scmp.lt.s32.totalorder %s235, 31
        %s237 = scalar_select %p236, %s235, 31
        %s238 = smul.addr %s237, 4
        %s239 = scalar_lea.vmem %s1, %s238
        %s240 = smul.u32 16, %s13
      $region44: #{bgb_gcn_forward.9} parent=35 // pred_fallthru
        _
    $region36: #{bgb_gcn_forward.9} parent=5 // pred_fallthru
      _
    %p241 = scmp.le.s32.totalorder 1, %s13
    %p242 = scmp.lt.s32.totalorder %s13, 3
    %p243 = pnand %p241, %p242
    %p244 = pneg %p243
    // Predicated region
    $region45: #{bgb_gcn_forward.9} parent=5 // pred_check
      _
    $region46: #{bgb_gcn_forward.9} parent=5 // pred_check_branch
      %246 = sbr.rel (%p243) target = $region48
    $region47: #{bgb_gcn_forward.9} parent=5 // pred_region
      %s247 = ssub.s32 %s13, 1
      %p248 = scmp.lt.s32.totalorder %s18, 1
      %s249 = scalar_select %p248, %s18, 1
      %s250 = smul.addr %s249, 4
      %s251 = scalar_lea.vmem %s0, %s250
      %p252 = pneg %p39
      %p253 = pneg %p36
      %s254 = smul.u32 16, %s18
      %p255 = scmp.lt.s32.totalorder %s254, 31
      %s256 = scalar_select %p255, %s254, 31
      %s257 = smul.addr %s256, 4
      %s258 = scalar_lea.vmem %s1, %s257
      %p259 = pneg %p65
      %p260 = pneg %p62
      %p261 = pneg %p86
      %p262 = pneg %p83
      %p263 = pneg %p107
      %p264 = pneg %p104
      %p265 = pneg %p128
      %p266 = pneg %p125
      %p267 = pneg %p149
      %p268 = pneg %p146
      %p269 = pneg %p170
      %p270 = pneg %p167
      %p271 = pneg %p191
      %p272 = pneg %p188
      %p273 = scmp.lt.s32.totalorder %s18, 1
      %s274 = scalar_select %p273, %s18, 1
      %s275 = smul.addr %s274, 4
      %s276 = scalar_lea.vmem %s0, %s275
      %s277 = smul.u32 16, %s18
      %p278 = scmp.lt.s32.totalorder %s277, 31
      %s279 = scalar_select %p278, %s277, 31
      %s280 = smul.addr %s279, 4
      %s281 = scalar_lea.vmem %s1, %s280
      %s282 = smul.u32 16, %s18
      %p284 = scmp.eq.s32.totalorder %s18, 0
      // Predicated region
      $region49: #{bgb_gcn_forward.9} parent=47 // pred_check
        %p285 = pneg %p284
      $region50: #{bgb_gcn_forward.9} parent=47 // pred_check_branch
        %287 = sbr.rel (%p285) target = $region52
      $region51: #{bgb_gcn_forward.9} parent=47 // pred_region
        %288 = vst [vmem:[#allocation2] sm:$0xff] 0.0
      $region52: #{bgb_gcn_forward.9} parent=47 // pred_fallthru
        _
      %v289 = vld [vmem:[#allocation2] sm:$0xff]
      %v290 = vld [vmem:[%s276] sm:$0xf]
      %v291 = vld [vmem:[%s281] sm:$0xf]
      %v292 = vld [vmem:[%s281 + $0x4] sm:$0xf]
      %v293 = vld [vmem:[%s281 + $0x8] sm:$0xf]
      %v294 = vld [vmem:[%s281 + $0xc] sm:$0xf]
      %v295 = vld [vmem:[%s281 + $0x10] sm:$0xf]
      %v296 = vld [vmem:[%s281 + $0x14] sm:$0xf]
      %v297 = vld [vmem:[%s281 + $0x18] sm:$0xf]
      %v298 = vld [vmem:[%s281 + $0x1c] sm:$0xf]
      %v299 = vld [vmem:[%s281 + $0x20] sm:$0xf]
      %v300 = vld [vmem:[%s281 + $0x24] sm:$0xf]
      %v301 = vld [vmem:[%s281 + $0x28] sm:$0xf]
      %v302 = vld [vmem:[%s281 + $0x2c] sm:$0xf]
      %v303 = vld [vmem:[%s281 + $0x30] sm:$0xf]
      %v304 = vld [vmem:[%s281 + $0x34] sm:$0xf]
      %v305 = vld [vmem:[%s281 + $0x38] sm:$0xf]
      %v306 = vld [vmem:[%s281 + $0x3c] sm:$0xf]
      %v323 = vunpack.c.l.b16 %v291
      %v324 = vunpack.c.l.b16 %v292
      %v325 = vunpack.c.l.b16 %v293
      %v326 = vunpack.c.l.b16 %v294
      %v327 = vunpack.c.l.b16 %v295
      %v328 = vunpack.c.l.b16 %v296
      %v329 = vunpack.c.l.b16 %v297
      %v330 = vunpack.c.l.b16 %v298
      %v331 = vunpack.c.l.b16 %v299
      %v332 = vunpack.c.l.b16 %v300
      %v333 = vunpack.c.l.b16 %v301
      %v334 = vunpack.c.l.b16 %v302
      %v335 = vunpack.c.l.b16 %v303
      %v336 = vunpack.c.l.b16 %v304
      %v337 = vunpack.c.l.b16 %v305
      %v338 = vunpack.c.l.b16 %v306
      %v339 = vpack.c.b16 %v324, %v323
      %v340 = vpack.c.b16 %v326, %v325
      %v341 = vpack.c.b16 %v328, %v327
      %v342 = vpack.c.b16 %v330, %v329
      %v343 = vpack.c.b16 %v332, %v331
      %v344 = vpack.c.b16 %v334, %v333
      %v345 = vpack.c.b16 %v336, %v335
      %v346 = vpack.c.b16 %v338, %v337
      %355 = vmatprep.subr.bf16.mxu0 0
      %356 = vmatpush1.bf16.msra.mxu0 %v339
      %357 = vmatprep.subr.bf16.mxu0 0
      %358 = vmatpush1.bf16.msra.mxu0 %v340
      %359 = vmatprep.subr.bf16.mxu0 0
      %360 = vmatpush1.bf16.msra.mxu0 %v341
      %361 = vmatprep.subr.bf16.mxu0 0
      %362 = vmatpush1.bf16.msra.mxu0 %v342
      %363 = vmatprep.subr.bf16.mxu0 0
      %364 = vmatpush1.bf16.msra.mxu0 %v343
      %365 = vmatprep.subr.bf16.mxu0 0
      %366 = vmatpush1.bf16.msra.mxu0 %v344
      %367 = vmatprep.subr.bf16.mxu0 0
      %368 = vmatpush1.bf16.msra.mxu0 %v345
      %369 = vmatprep.subr.bf16.mxu0 0
      %370 = vmatpush1.bf16.msra.mxu0 %v346
      %371 = vmatprep.subr.bf16.mxu0 0
      %372 = vmatpush1.bf16.msra.mxu0 0
      %373 = vmatprep.subr.bf16.mxu0 0
      %374 = vmatpush1.bf16.msra.mxu0 0
      %375 = vmatprep.subr.bf16.mxu0 0
      %376 = vmatpush1.bf16.msra.mxu0 0
      %377 = vmatprep.subr.bf16.mxu0 0
      %378 = vmatpush1.bf16.msra.mxu0 0
      %379 = vmatprep.subr.bf16.mxu0 0
      %380 = vmatpush1.bf16.msra.mxu0 0
      %381 = vmatprep.subr.bf16.mxu0 0
      %382 = vmatpush1.bf16.msra.mxu0 0
      %383 = vmatprep.subr.bf16.mxu0 0
      %384 = vmatpush1.bf16.msra.mxu0 0
      %385 = vmatprep.subr.bf16.mxu0 0
      %386 = vmatpush1.bf16.msra.mxu0 0
      %387 = vmatprep.mubr.bf16.mxu0 0
      %388 = vmatmul.mubr.bf16.gmra.mrb[0].mxu0 %v290
      %v389 = vpop.f32.mrb[0].mxu0
      %v390 = vadd.f32 0.0, %v389
      %v391 = vpop.f32.mrb[0].mxu0
      %v392 = vpop.f32.mrb[0].mxu0
      %v393 = vpop.f32.mrb[0].mxu0
      %394 = vdwg.mxu0
      %v395 = vadd.f32 %v289, %v390
      %396 = vst [vmem:[#allocation2] sm:$0xff] %v395
      %p397 = scmp.eq.s32.totalorder %s18, 1
      // Predicated region
      $region53: #{bgb_gcn_forward.9} parent=47 // pred_check
        %p398 = pneg %p397
      $region54: #{bgb_gcn_forward.9} parent=47 // pred_check_branch
        %400 = sbr.rel (%p398) target = $region56
      $region55: #{bgb_gcn_forward.9} parent=47 // pred_region
        %v401 = vld [vmem:[#allocation2] sm:$0xff]
        %v402 = vld [vmem:[%s2] sm:$0xff]
        %404 = vset.pattern.permute.xlu0 0
        %405 = vperm.xlu0 %404, %v402
        %v406 = vpop.permute.xlu0 %405
        %v408 = vmul.f32 %v401, %v406
        %v409 = vpack.c.bf16 %v408, %v408
        %v410 = vld [vmem:[%s3] sm:$0xf]
        %v411 = vld [vmem:[%s3 + $0x4] sm:$0xf]
        %v412 = vld [vmem:[%s3 + $0x8] sm:$0xf]
        %v413 = vld [vmem:[%s3 + $0xc] sm:$0xf]
        %v414 = vld [vmem:[%s3 + $0x10] sm:$0xf]
        %v415 = vld [vmem:[%s3 + $0x14] sm:$0xf]
        %v416 = vld [vmem:[%s3 + $0x18] sm:$0xf]
        %v417 = vld [vmem:[%s3 + $0x1c] sm:$0xf]
        %v418 = vld [vmem:[%s3 + $0x20] sm:$0xf]
        %v419 = vld [vmem:[%s3 + $0x24] sm:$0xf]
        %v420 = vld [vmem:[%s3 + $0x28] sm:$0xf]
        %v421 = vld [vmem:[%s3 + $0x2c] sm:$0xf]
        %v422 = vld [vmem:[%s3 + $0x30] sm:$0xf]
        %v423 = vld [vmem:[%s3 + $0x34] sm:$0xf]
        %v424 = vld [vmem:[%s3 + $0x38] sm:$0xf]
        %v425 = vld [vmem:[%s3 + $0x3c] sm:$0xf]
        %v426 = vld [vmem:[%s4] sm:$0x1]
        %v428 = vlaneseq
        %v429 = vshrl.u32 %v428, 7
        %v430 = vsub.s32 0, %v429
        %v431 = vrot.slane %v426, %v430
        %v449 = vunpack.c.l.b16 %v410
        %v450 = vunpack.c.l.b16 %v411
        %v451 = vunpack.c.l.b16 %v412
        %v452 = vunpack.c.l.b16 %v413
        %v453 = vunpack.c.l.b16 %v414
        %v454 = vunpack.c.l.b16 %v415
        %v455 = vunpack.c.l.b16 %v416
        %v456 = vunpack.c.l.b16 %v417
        %v457 = vunpack.c.l.b16 %v418
        %v458 = vunpack.c.l.b16 %v419
        %v459 = vunpack.c.l.b16 %v420
        %v460 = vunpack.c.l.b16 %v421
        %v461 = vunpack.c.l.b16 %v422
        %v462 = vunpack.c.l.b16 %v423
        %v463 = vunpack.c.l.b16 %v424
        %v464 = vunpack.c.l.b16 %v425
        %v465 = vpack.c.b16 %v450, %v449
        %v466 = vpack.c.b16 %v452, %v451
        %v467 = vpack.c.b16 %v454, %v453
        %v468 = vpack.c.b16 %v456, %v455
        %v469 = vpack.c.b16 %v458, %v457
        %v470 = vpack.c.b16 %v460, %v459
        %v471 = vpack.c.b16 %v462, %v461
        %v472 = vpack.c.b16 %v464, %v463
        %481 = vmatprep.subr.bf16.mxu0 0
        %482 = vmatpush1.bf16.msra.mxu0 %v465
        %483 = vmatprep.subr.bf16.mxu0 0
        %484 = vmatpush1.bf16.msra.mxu0 %v466
        %485 = vmatprep.subr.bf16.mxu0 0
        %486 = vmatpush1.bf16.msra.mxu0 %v467
        %487 = vmatprep.subr.bf16.mxu0 0
        %488 = vmatpush1.bf16.msra.mxu0 %v468
        %489 = vmatprep.subr.bf16.mxu0 0
        %490 = vmatpush1.bf16.msra.mxu0 %v469
        %491 = vmatprep.subr.bf16.mxu0 0
        %492 = vmatpush1.bf16.msra.mxu0 %v470
        %493 = vmatprep.subr.bf16.mxu0 0
        %494 = vmatpush1.bf16.msra.mxu0 %v471
        %495 = vmatprep.subr.bf16.mxu0 0
        %496 = vmatpush1.bf16.msra.mxu0 %v472
        %497 = vmatprep.subr.bf16.mxu0 0
        %498 = vmatpush1.bf16.msra.mxu0 0
        %499 = vmatprep.subr.bf16.mxu0 0
        %500 = vmatpush1.bf16.msra.mxu0 0
        %501 = vmatprep.subr.bf16.mxu0 0
        %502 = vmatpush1.bf16.msra.mxu0 0
        %503 = vmatprep.subr.bf16.mxu0 0
        %504 = vmatpush1.bf16.msra.mxu0 0
        %505 = vmatprep.subr.bf16.mxu0 0
        %506 = vmatpush1.bf16.msra.mxu0 0
        %507 = vmatprep.subr.bf16.mxu0 0
        %508 = vmatpush1.bf16.msra.mxu0 0
        %509 = vmatprep.subr.bf16.mxu0 0
        %510 = vmatpush1.bf16.msra.mxu0 0
        %511 = vmatprep.subr.bf16.mxu0 0
        %512 = vmatpush1.bf16.msra.mxu0 0
        %513 = vmatprep.mubr.bf16.mxu0 0
        %514 = vmatmul.mubr.bf16.gmra.mrb[0].mxu0 %v409
        %v515 = vpop.f32.mrb[0].mxu0
        %v516 = vadd.f32 %v431, %v515
        %v517 = vpop.f32.mrb[0].mxu0
        %v518 = vpop.f32.mrb[0].mxu0
        %v519 = vpop.f32.mrb[0].mxu0
        %520 = vdwg.mxu0
        %v521 = vmax.f32 %v516, 0.0
        %v522 = vpack.c.bf16 %v521, %v521
        %v523 = vld [vmem:[%s5] sm:$0xf]
        %v524 = vld [vmem:[%s5 + $0x4] sm:$0xf]
        %v525 = vld [vmem:[%s5 + $0x8] sm:$0xf]
        %v526 = vld [vmem:[%s5 + $0xc] sm:$0xf]
        %v527 = vld [vmem:[%s5 + $0x10] sm:$0xf]
        %v528 = vld [vmem:[%s5 + $0x14] sm:$0xf]
        %v529 = vld [vmem:[%s5 + $0x18] sm:$0xf]
        %v530 = vld [vmem:[%s5 + $0x1c] sm:$0xf]
        %v531 = vld [vmem:[%s5 + $0x20] sm:$0xf]
        %v532 = vld [vmem:[%s5 + $0x24] sm:$0xf]
        %v533 = vld [vmem:[%s5 + $0x28] sm:$0xf]
        %v534 = vld [vmem:[%s5 + $0x2c] sm:$0xf]
        %v535 = vld [vmem:[%s5 + $0x30] sm:$0xf]
        %v536 = vld [vmem:[%s5 + $0x34] sm:$0xf]
        %v537 = vld [vmem:[%s5 + $0x38] sm:$0xf]
        %v538 = vld [vmem:[%s5 + $0x3c] sm:$0xf]
        %v539 = vld [vmem:[%s6] sm:$0x1]
        %v541 = vlaneseq
        %v542 = vshrl.u32 %v541, 7
        %v543 = vsub.s32 0, %v542
        %v544 = vrot.slane %v539, %v543
        %v562 = vunpack.c.l.b16 %v523
        %v563 = vunpack.c.l.b16 %v524
        %v564 = vunpack.c.l.b16 %v525
        %v565 = vunpack.c.l.b16 %v526
        %v566 = vunpack.c.l.b16 %v527
        %v567 = vunpack.c.l.b16 %v528
        %v568 = vunpack.c.l.b16 %v529
        %v569 = vunpack.c.l.b16 %v530
        %v570 = vunpack.c.l.b16 %v531
        %v571 = vunpack.c.l.b16 %v532
        %v572 = vunpack.c.l.b16 %v533
        %v573 = vunpack.c.l.b16 %v534
        %v574 = vunpack.c.l.b16 %v535
        %v575 = vunpack.c.l.b16 %v536
        %v576 = vunpack.c.l.b16 %v537
        %v577 = vunpack.c.l.b16 %v538
        %v578 = vpack.c.b16 %v563, %v562
        %v579 = vpack.c.b16 %v565, %v564
        %v580 = vpack.c.b16 %v567, %v566
        %v581 = vpack.c.b16 %v569, %v568
        %v582 = vpack.c.b16 %v571, %v570
        %v583 = vpack.c.b16 %v573, %v572
        %v584 = vpack.c.b16 %v575, %v574
        %v585 = vpack.c.b16 %v577, %v576
        %594 = vmatprep.subr.bf16.mxu0 0
        %595 = vmatpush1.bf16.msra.mxu0 %v578
        %596 = vmatprep.subr.bf16.mxu0 0
        %597 = vmatpush1.bf16.msra.mxu0 %v579
        %598 = vmatprep.subr.bf16.mxu0 0
        %599 = vmatpush1.bf16.msra.mxu0 %v580
        %600 = vmatprep.subr.bf16.mxu0 0
        %601 = vmatpush1.bf16.msra.mxu0 %v581
        %602 = vmatprep.subr.bf16.mxu0 0
        %603 = vmatpush1.bf16.msra.mxu0 %v582
        %604 = vmatprep.subr.bf16.mxu0 0
        %605 = vmatpush1.bf16.msra.mxu0 %v583
        %606 = vmatprep.subr.bf16.mxu0 0
        %607 = vmatpush1.bf16.msra.mxu0 %v584
        %608 = vmatprep.subr.bf16.mxu0 0
        %609 = vmatpush1.bf16.msra.mxu0 %v585
        %610 = vmatprep.subr.bf16.mxu0 0
        %611 = vmatpush1.bf16.msra.mxu0 0
        %612 = vmatprep.subr.bf16.mxu0 0
        %613 = vmatpush1.bf16.msra.mxu0 0
        %614 = vmatprep.subr.bf16.mxu0 0
        %615 = vmatpush1.bf16.msra.mxu0 0
        %616 = vmatprep.subr.bf16.mxu0 0
        %617 = vmatpush1.bf16.msra.mxu0 0
        %618 = vmatprep.subr.bf16.mxu0 0
        %619 = vmatpush1.bf16.msra.mxu0 0
        %620 = vmatprep.subr.bf16.mxu0 0
        %621 = vmatpush1.bf16.msra.mxu0 0
        %622 = vmatprep.subr.bf16.mxu0 0
        %623 = vmatpush1.bf16.msra.mxu0 0
        %624 = vmatprep.subr.bf16.mxu0 0
        %625 = vmatpush1.bf16.msra.mxu0 0
        %626 = vmatprep.mubr.bf16.mxu0 0
        %627 = vmatmul.mubr.bf16.gmra.mrb[0].mxu0 %v522
        %v628 = vpop.f32.mrb[0].mxu0
        %v629 = vadd.f32 %v544, %v628
        %v630 = vpop.f32.mrb[0].mxu0
        %v631 = vpop.f32.mrb[0].mxu0
        %v632 = vpop.f32.mrb[0].mxu0
        %633 = vdwg.mxu0
        %634 = vst [vmem:[%s7] sm:$0xff] %v629
      $region56: #{bgb_gcn_forward.9} parent=47 // pred_fallthru
        _
      // Predicated region
      $region57: #{bgb_gcn_forward.9} parent=47 // pred_check
        %p635 = pneg %p188
      $region58: #{bgb_gcn_forward.9} parent=47 // pred_check_branch
        %637 = sbr.rel (%p635) target = $region60
      $region59: #{bgb_gcn_forward.9} parent=47 // pred_region
        _
      $region60: #{bgb_gcn_forward.9} parent=47 // pred_fallthru
        _
      // Predicated region
      $region61: #{bgb_gcn_forward.9} parent=47 // pred_check
        %p638 = pneg %p188
      $region62: #{bgb_gcn_forward.9} parent=47 // pred_check_branch
        %640 = sbr.rel (%p638) target = $region64
      $region63: #{bgb_gcn_forward.9} parent=47 // pred_region
        _
      $region64: #{bgb_gcn_forward.9} parent=47 // pred_fallthru
        _
    $region48: #{bgb_gcn_forward.9} parent=5 // pred_fallthru
      _
    %p641 = scmp.le.s32.totalorder 2, %s13
    // Predicated region
    $region65: #{bgb_gcn_forward.9} parent=5 // pred_check
      %p642 = pneg %p641
    $region66: #{bgb_gcn_forward.9} parent=5 // pred_check_branch
      %644 = sbr.rel (%p642) target = $region68
    $region67: #{bgb_gcn_forward.9} parent=5 // pred_region
      %s645 = ssub.s32 %s13, 2
    $region68: #{bgb_gcn_forward.9} parent=5 // pred_fallthru
      _
  $region6: #{bgb_gcn_forward.9} parent=0 // loop_footer
    %s17 = sadd.s32 1, %s13
  $region7: #{bgb_gcn_forward.9} parent=0 // loop_footer_branch
    %12 = sbr.rel target = $region3
  $region8: #{bgb_gcn_forward.9} parent=0 // loop_exit
    _

</llo_original>
